<compile_context>
chip_gen: v7x
topology: tpu7x:2x2x1
jax: 0.10.0
libtpu: 0.0.40
codegen_flags: <defaults>
</compile_context>

<pallas_src>
import functools

import jax
import jax.numpy as jnp
from jax.experimental import pallas as pl
from jax.experimental.pallas import tpu as pltpu


def _realnvp_kernel(x_ref,
                    w1_ref, b1_ref, w2_ref, b2_ref,
                    w3s_ref, b3s_ref, w3t_ref, b3t_ref,
                    p00_ref, p01_ref, p10_ref, p11_ref,
                    y_ref, *, half, n_blocks, n_layers, compute_dtype):
    f32 = jnp.float32
    x = x_ref[...].astype(f32)              # one dense (bm, C) load
    h0 = x[:, :half]
    h1 = x[:, half:]

    n_total = n_blocks * n_layers
    for layer in range(n_total):            # static unroll (small L)
        if layer > 0 and layer % n_layers == 0:
            # Channel permutation between blocks, expressed as block matmuls
            # with the 0/1 quadrants of the permutation matrix.  Quadrants are
            # stored in compute_dtype (exact for 0/1) and upcast to f32 here so
            # the permuted activations keep full precision.
            k = layer // n_layers - 1
            p00 = p00_ref[k].astype(f32)
            p01 = p01_ref[k].astype(f32)
            p10 = p10_ref[k].astype(f32)
            p11 = p11_ref[k].astype(f32)
            g0 = (jnp.dot(h0, p00, preferred_element_type=f32)
                  + jnp.dot(h1, p10, preferred_element_type=f32))
            g1 = (jnp.dot(h0, p01, preferred_element_type=f32)
                  + jnp.dot(h1, p11, preferred_element_type=f32))
            h0, h1 = g0, g1

        # ---- affine coupling: st = MLP(h0); (h0, h1) <- (h1*exp(s)+t, h0) ----
        # Weight refs are already in compute_dtype (cast once in the wrapper).
        h0c = h0.astype(compute_dtype)
        a = jnp.maximum(
            jnp.dot(h0c, w1_ref[layer], preferred_element_type=f32)
            + b1_ref[layer], 0.0)
        a = jnp.maximum(
            jnp.dot(a.astype(compute_dtype), w2_ref[layer],
                    preferred_element_type=f32) + b2_ref[layer], 0.0)
        ac = a.astype(compute_dtype)
        s = jnp.dot(ac, w3s_ref[layer], preferred_element_type=f32) + b3s_ref[layer]
        t = jnp.dot(ac, w3t_ref[layer], preferred_element_type=f32) + b3t_ref[layer]
        # tanh/exp kept in f32 (EUP); bf16 EUP on v6e/v7x is a possible further
        # tweak if a bundle dump shows the EUP slot binding.
        s = 0.1 * jnp.tanh(s)
        h0, h1 = h1 * jnp.exp(s) + t, h0

    # Single lane-dense (bm, C) store into the output slab.
    y_ref[...] = jnp.concatenate([h0, h1], axis=-1).astype(y_ref.dtype)


def _round_up(n, m):
    return ((n + m - 1) // m) * m


def realnvp_forward(x, params, *, n_blocks, n_layers,
                    block_m=1024, compute_dtype=jnp.bfloat16,
                    vmem_limit_bytes=None, input_buffering=None):
    """Fused RealNVP forward.  x: (B, C) float32, C even."""
    B, C = x.shape
    assert C % 2 == 0, "RealNVP needs an even number of channels"
    half = C // 2
    L = n_blocks * n_layers
    assert params["w1"].shape[0] == L

    # One-time wrapper-side cast of all matmul operands to compute_dtype.
    # Biases stay f32 (added after the f32 accumulation).
    cast = lambda w: w.astype(compute_dtype)
    weights = [cast(params["w1"]), params["b1"],
               cast(params["w2"]), params["b2"],
               cast(params["w3s"]), params["b3s"],
               cast(params["w3t"]), params["b3t"],
               cast(params["p00"]), cast(params["p01"]),
               cast(params["p10"]), cast(params["p11"])]
    weight_bytes = sum(int(w.size) * w.dtype.itemsize for w in weights)
    itemsize = x.dtype.itemsize

    def est_vmem(bm_):
        # double-buffered (bm, C) input + output tiles, plus (conservatively)
        # 2x the VMEM-resident constant weight blocks.
        return 4 * bm_ * C * itemsize + 2 * weight_bytes

    # Per-generation VMEM budget (v7x: 64 MiB/TC physical, v5e/v6e: 128 MiB).
    try:
        vmem_cap = int(pltpu.get_tpu_info().vmem_capacity_bytes)
    except Exception:
        vmem_cap = 64 * 1024 * 1024          # most conservative (v7x per-TC)
    vmem_budget = (vmem_cap * 3) // 8        # 24 MiB on v7x, 48 MiB on v5e/v6e

    # Batch tile: as large as requested (amortizes ~0.35us per grid step), but
    # keep >= 2 grid steps when possible (megacore), stay inside the VMEM
    # budget, and prefer an even step count for v7x's two TensorCores.
    bm = max(8, min(block_m, _round_up(pl.cdiv(B, 2), 8)))
    while bm > 8 and est_vmem(bm) > vmem_budget:
        bm = max(8, _round_up(bm // 2, 8))
    steps = pl.cdiv(B, bm)
    if steps > 2 and steps % 2 == 1:
        bm = max(8, _round_up(pl.cdiv(B, steps + 1), 8))
        steps = pl.cdiv(B, bm)
    grid = (steps,)

    if vmem_limit_bytes is None:
        vmem_limit_bytes = min(max(vmem_cap // 2, est_vmem(bm) + (8 << 20)),
                               (vmem_cap * 7) // 8)

    # BlockSpecs: lane-dense (bm, C) activation tiles; weights as full-array
    # constant-index blocks (re-fetch elided, VMEM-resident across the grid).
    x_spec_kwargs = {}
    if input_buffering is not None:
        x_spec_kwargs["pipeline_mode"] = pl.Buffered(int(input_buffering))
    x_spec = pl.BlockSpec((bm, C), lambda i: (i, 0), **x_spec_kwargs)
    y_spec = pl.BlockSpec((bm, C), lambda i: (i, 0))

    def const_spec(arr):
        return pl.BlockSpec(arr.shape, lambda i, _nd=arr.ndim: (0,) * _nd)

    in_specs = [x_spec] + [const_spec(w) for w in weights]
    out_shape = jax.ShapeDtypeStruct((B, C), x.dtype)

    # Advisory cost estimate for XLA's scheduler.
    n_perm = max(n_blocks - 1, 0)
    flops = B * (L + n_perm) * 8 * half * half
    transcendentals = B * L * 2 * half                      # tanh + exp / layer
    bytes_accessed = 2 * B * C * itemsize + weight_bytes

    kernel = functools.partial(_realnvp_kernel, half=half, n_blocks=n_blocks,
                               n_layers=n_layers, compute_dtype=compute_dtype)

    return pl.pallas_call(
        kernel,
        out_shape=out_shape,
        grid_spec=pltpu.PrefetchScalarGridSpec(
            num_scalar_prefetch=0,
            grid=grid,
            in_specs=in_specs,
            out_specs=y_spec,
        ),
        compiler_params=pltpu.CompilerParams(
            dimension_semantics=("parallel",),
            vmem_limit_bytes=int(vmem_limit_bytes),
        ),
        cost_estimate=pl.CostEstimate(
            flops=int(flops),
            transcendentals=int(transcendentals),
            bytes_accessed=int(bytes_accessed),
        ),
    )(x, *weights)


def init_realnvp_params(key, in_channels, n_blocks, n_layers):
    """Parameters matching the PyTorch module's layer shapes.

    nn.Linear weights are stored pre-transposed to (fan_in, fan_out); the
    output Linear of each coupling MLP is split into its s / t halves; the
    inter-block permutation matrices are split into (half, half) quadrants so
    the kernel never gathers along the lane axis.  "perms" holds the integer
    permutations for the pure-JAX reference.
    """
    assert in_channels % 2 == 0 and n_blocks >= 1 and n_layers >= 1
    half = in_channels // 2
    L = n_blocks * n_layers

    def linear(k, fan_in, fan_out):
        kw, kb = jax.random.split(k)
        bound = 1.0 / (fan_in ** 0.5)
        w = jax.random.uniform(kw, (fan_in, fan_out), jnp.float32, -bound, bound)
        b = jax.random.uniform(kb, (1, fan_out), jnp.float32, -bound, bound)
        return w, b

    key_layers, key_perm = jax.random.split(key)
    layer_keys = jax.random.split(key_layers, L)
    w1, b1, w2, b2, w3s, b3s, w3t, b3t = ([] for _ in range(8))
    for l in range(L):
        k1, k2, k3 = jax.random.split(layer_keys[l], 3)
        w1_l, b1_l = linear(k1, half, half)
        w2_l, b2_l = linear(k2, half, half)
        w3_l, b3_l = linear(k3, half, in_channels)
        w1.append(w1_l); b1.append(b1_l)
        w2.append(w2_l); b2.append(b2_l)
        w3s.append(w3_l[:, :half]); b3s.append(b3_l[:, :half])
        w3t.append(w3_l[:, half:]); b3t.append(b3_l[:, half:])

    n_perm = n_blocks - 1
    if n_perm > 0:
        perm_keys = jax.random.split(key_perm, n_perm)
        perms = jnp.stack([jax.random.permutation(perm_keys[k], in_channels)
                           for k in range(n_perm)])
        # P with (x @ P)[:, j] == x[:, perm[j]]
        pmats = (jnp.arange(in_channels)[None, :, None]
                 == perms[:, None, :]).astype(jnp.float32)
    else:
        perms = jnp.zeros((0, in_channels), jnp.int32)
        pmats = jnp.eye(in_channels, dtype=jnp.float32)[None]   # unused dummy

    return {
        "w1": jnp.stack(w1), "b1": jnp.stack(b1),
        "w2": jnp.stack(w2), "b2": jnp.stack(b2),
        "w3s": jnp.stack(w3s), "b3s": jnp.stack(b3s),
        "w3t": jnp.stack(w3t), "b3t": jnp.stack(b3t),
        "p00": pmats[:, :half, :half], "p01": pmats[:, :half, half:],
        "p10": pmats[:, half:, :half], "p11": pmats[:, half:, half:],
        "perms": perms,
    }


def realnvp_reference(x, params, *, n_blocks, n_layers):
    """Pure-JAX (f32) reference of the same forward pass."""
    half = x.shape[-1] // 2
    h = x
    for layer in range(n_blocks * n_layers):
        if layer > 0 and layer % n_layers == 0:
            h = h[:, params["perms"][layer // n_layers - 1]]
        x0, x1 = h[:, :half], h[:, half:]
        a = jnp.maximum(x0 @ params["w1"][layer] + params["b1"][layer], 0.0)
        a = jnp.maximum(a @ params["w2"][layer] + params["b2"][layer], 0.0)
        s = 0.1 * jnp.tanh(a @ params["w3s"][layer] + params["b3s"][layer])
        t = a @ params["w3t"][layer] + params["b3t"][layer]
        h = jnp.concatenate([x1 * jnp.exp(s) + t, x0], axis=-1)
    return h


if __name__ == "__main__":
    in_channels, n_blocks, n_layers = 4, 2, 2
    batch = 16

    key = jax.random.PRNGKey(0)
    kx, kp = jax.random.split(key)
    x = jax.random.normal(kx, (batch, in_channels), dtype=jnp.float32)
    params = init_realnvp_params(kp, in_channels, n_blocks, n_layers)

    ref = realnvp_reference(x, params, n_blocks=n_blocks, n_layers=n_layers)

    # f32 MXU operands: matches the reference tightly.
    out_f32 = realnvp_forward(x, params, n_blocks=n_blocks, n_layers=n_layers,
                              compute_dtype=jnp.float32)
    out_f32 = jax.block_until_ready(out_f32)
    assert out_f32.shape == x.shape
    assert jnp.allclose(out_f32, ref, atol=2e-3, rtol=2e-3)

    # bf16 MXU operands (default fast path), f32 accumulate / VPU / EUP math.
    out_bf16 = realnvp_forward(x, params, n_blocks=n_blocks, n_layers=n_layers,
                               compute_dtype=jnp.bfloat16)
    out_bf16 = jax.block_until_ready(out_bf16)
    assert jnp.allclose(out_bf16, ref, atol=5e-2, rtol=5e-2)

    # Ragged batch exercises the masked partial last block (no wrapper pad).
    out_ragged = realnvp_forward(x[:13], params, n_blocks=n_blocks,
                                 n_layers=n_layers)
    out_ragged = jax.block_until_ready(out_ragged)
    assert out_ragged.shape == (13, in_channels)
    assert jnp.allclose(out_ragged, ref[:13], atol=5e-2, rtol=5e-2)

    print("KERNEL_OK")
</pallas_src>

<mosaic_0001>
module attributes {stable_mosaic.version = 11 : i64} {
  func.func @_realnvp_kernel(%arg0: i32, %arg1: memref<8x4xf32, #tpu.memory_space<vmem>>, %arg2: memref<4x2x2xf32, #tpu.memory_space<vmem>>, %arg3: memref<4x1x2xf32, #tpu.memory_space<vmem>>, %arg4: memref<4x2x2xf32, #tpu.memory_space<vmem>>, %arg5: memref<4x1x2xf32, #tpu.memory_space<vmem>>, %arg6: memref<4x2x2xf32, #tpu.memory_space<vmem>>, %arg7: memref<4x1x2xf32, #tpu.memory_space<vmem>>, %arg8: memref<4x2x2xf32, #tpu.memory_space<vmem>>, %arg9: memref<4x1x2xf32, #tpu.memory_space<vmem>>, %arg10: memref<1x2x2xf32, #tpu.memory_space<vmem>>, %arg11: memref<1x2x2xf32, #tpu.memory_space<vmem>>, %arg12: memref<1x2x2xf32, #tpu.memory_space<vmem>>, %arg13: memref<1x2x2xf32, #tpu.memory_space<vmem>>, %arg14: memref<8x4xf32, #tpu.memory_space<vmem>>) attributes {dimension_semantics = [#tpu.dimension_semantics<parallel>], iteration_bounds = array<i64: 2>, scalar_prefetch = 0 : i64, scratch_operands = 0 : i64, tpu.core_type = #tpu.core_type<tc>, window_params = [{transform_indices = @transform_0, window_bounds = array<i64: 8, 4>}, {pipeline_mode = #tpu.pipeline_mode<synchronous>, transform_indices = @transform_1, window_bounds = array<i64: 4, 2, 2>}, {pipeline_mode = #tpu.pipeline_mode<synchronous>, transform_indices = @transform_2, window_bounds = array<i64: 4, 1, 2>}, {pipeline_mode = #tpu.pipeline_mode<synchronous>, transform_indices = @transform_3, window_bounds = array<i64: 4, 2, 2>}, {pipeline_mode = #tpu.pipeline_mode<synchronous>, transform_indices = @transform_4, window_bounds = array<i64: 4, 1, 2>}, {pipeline_mode = #tpu.pipeline_mode<synchronous>, transform_indices = @transform_5, window_bounds = array<i64: 4, 2, 2>}, {pipeline_mode = #tpu.pipeline_mode<synchronous>, transform_indices = @transform_6, window_bounds = array<i64: 4, 1, 2>}, {pipeline_mode = #tpu.pipeline_mode<synchronous>, transform_indices = @transform_7, window_bounds = array<i64: 4, 2, 2>}, {pipeline_mode = #tpu.pipeline_mode<synchronous>, transform_indices = @transform_8, window_bounds = array<i64: 4, 1, 2>}, {pipeline_mode = #tpu.pipeline_mode<synchronous>, transform_indices = @transform_9, window_bounds = array<i64: 1, 2, 2>}, {pipeline_mode = #tpu.pipeline_mode<synchronous>, transform_indices = @transform_10, window_bounds = array<i64: 1, 2, 2>}, {pipeline_mode = #tpu.pipeline_mode<synchronous>, transform_indices = @transform_11, window_bounds = array<i64: 1, 2, 2>}, {pipeline_mode = #tpu.pipeline_mode<synchronous>, transform_indices = @transform_12, window_bounds = array<i64: 1, 2, 2>}, {transform_indices = @transform_13, window_bounds = array<i64: 8, 4>}]} {
    %c0 = arith.constant 0 : index
    %c0_0 = arith.constant 0 : index
    %0 = vector.load %arg1[%c0, %c0_0] : memref<8x4xf32, #tpu.memory_space<vmem>>, vector<8x4xf32>
    %1 = vector.extract_strided_slice %0 {offsets = [0, 0], sizes = [8, 2], strides = [1, 1]} : vector<8x4xf32> to vector<8x2xf32>
    %2 = vector.extract_strided_slice %0 {offsets = [0, 2], sizes = [8, 2], strides = [1, 1]} : vector<8x4xf32> to vector<8x2xf32>
    %c0_1 = arith.constant 0 : index
    %c0_2 = arith.constant 0 : index
    %c0_3 = arith.constant 0 : index
    %3 = vector.load %arg2[%c0_1, %c0_2, %c0_3] : memref<4x2x2xf32, #tpu.memory_space<vmem>>, vector<1x2x2xf32>
    %4 = vector.shape_cast %3 : vector<1x2x2xf32> to vector<2x2xf32>
    %cst = arith.constant dense<0.000000e+00> : vector<8x2xf32>
    %5 = tpu.matmul %1, %4, %cst {dimension_numbers = #tpu.dot_dimension_numbers<[1], [0], [0], [1], [0, 0, 1, 1], [], []>} : vector<8x2xf32>, vector<2x2xf32>, vector<8x2xf32> -> vector<8x2xf32>
    %c0_4 = arith.constant 0 : index
    %c0_5 = arith.constant 0 : index
    %c0_6 = arith.constant 0 : index
    %6 = vector.load %arg3[%c0_4, %c0_5, %c0_6] : memref<4x1x2xf32, #tpu.memory_space<vmem>>, vector<1x1x2xf32>
    %7 = vector.shape_cast %6 : vector<1x1x2xf32> to vector<1x2xf32>
    %8 = vector.broadcast %7 : vector<1x2xf32> to vector<8x2xf32>
    %9 = arith.addf %5, %8 : vector<8x2xf32>
    %cst_7 = arith.constant 0.000000e+00 : f32
    %10 = vector.broadcast %cst_7 : f32 to vector<8x2xf32>
    %11 = arith.maximumf %9, %10 : vector<8x2xf32>
    %c0_8 = arith.constant 0 : index
    %c0_9 = arith.constant 0 : index
    %c0_10 = arith.constant 0 : index
    %12 = vector.load %arg4[%c0_8, %c0_9, %c0_10] : memref<4x2x2xf32, #tpu.memory_space<vmem>>, vector<1x2x2xf32>
    %13 = vector.shape_cast %12 : vector<1x2x2xf32> to vector<2x2xf32>
    %cst_11 = arith.constant dense<0.000000e+00> : vector<8x2xf32>
    %14 = tpu.matmul %11, %13, %cst_11 {dimension_numbers = #tpu.dot_dimension_numbers<[1], [0], [0], [1], [0, 0, 1, 1], [], []>} : vector<8x2xf32>, vector<2x2xf32>, vector<8x2xf32> -> vector<8x2xf32>
    %c0_12 = arith.constant 0 : index
    %c0_13 = arith.constant 0 : index
    %c0_14 = arith.constant 0 : index
    %15 = vector.load %arg5[%c0_12, %c0_13, %c0_14] : memref<4x1x2xf32, #tpu.memory_space<vmem>>, vector<1x1x2xf32>
    %16 = vector.shape_cast %15 : vector<1x1x2xf32> to vector<1x2xf32>
    %17 = vector.broadcast %16 : vector<1x2xf32> to vector<8x2xf32>
    %18 = arith.addf %14, %17 : vector<8x2xf32>
    %cst_15 = arith.constant 0.000000e+00 : f32
    %19 = vector.broadcast %cst_15 : f32 to vector<8x2xf32>
    %20 = arith.maximumf %18, %19 : vector<8x2xf32>
    %c0_16 = arith.constant 0 : index
    %c0_17 = arith.constant 0 : index
    %c0_18 = arith.constant 0 : index
    %21 = vector.load %arg6[%c0_16, %c0_17, %c0_18] : memref<4x2x2xf32, #tpu.memory_space<vmem>>, vector<1x2x2xf32>
    %22 = vector.shape_cast %21 : vector<1x2x2xf32> to vector<2x2xf32>
    %cst_19 = arith.constant dense<0.000000e+00> : vector<8x2xf32>
    %23 = tpu.matmul %20, %22, %cst_19 {dimension_numbers = #tpu.dot_dimension_numbers<[1], [0], [0], [1], [0, 0, 1, 1], [], []>} : vector<8x2xf32>, vector<2x2xf32>, vector<8x2xf32> -> vector<8x2xf32>
    %c0_20 = arith.constant 0 : index
    %c0_21 = arith.constant 0 : index
    %c0_22 = arith.constant 0 : index
    %24 = vector.load %arg7[%c0_20, %c0_21, %c0_22] : memref<4x1x2xf32, #tpu.memory_space<vmem>>, vector<1x1x2xf32>
    %25 = vector.shape_cast %24 : vector<1x1x2xf32> to vector<1x2xf32>
    %26 = vector.broadcast %25 : vector<1x2xf32> to vector<8x2xf32>
    %27 = arith.addf %23, %26 : vector<8x2xf32>
    %c0_23 = arith.constant 0 : index
    %c0_24 = arith.constant 0 : index
    %c0_25 = arith.constant 0 : index
    %28 = vector.load %arg8[%c0_23, %c0_24, %c0_25] : memref<4x2x2xf32, #tpu.memory_space<vmem>>, vector<1x2x2xf32>
    %29 = vector.shape_cast %28 : vector<1x2x2xf32> to vector<2x2xf32>
    %cst_26 = arith.constant dense<0.000000e+00> : vector<8x2xf32>
    %30 = tpu.matmul %20, %29, %cst_26 {dimension_numbers = #tpu.dot_dimension_numbers<[1], [0], [0], [1], [0, 0, 1, 1], [], []>} : vector<8x2xf32>, vector<2x2xf32>, vector<8x2xf32> -> vector<8x2xf32>
    %c0_27 = arith.constant 0 : index
    %c0_28 = arith.constant 0 : index
    %c0_29 = arith.constant 0 : index
    %31 = vector.load %arg9[%c0_27, %c0_28, %c0_29] : memref<4x1x2xf32, #tpu.memory_space<vmem>>, vector<1x1x2xf32>
    %32 = vector.shape_cast %31 : vector<1x1x2xf32> to vector<1x2xf32>
    %33 = vector.broadcast %32 : vector<1x2xf32> to vector<8x2xf32>
    %34 = arith.addf %30, %33 : vector<8x2xf32>
    %35 = math.tanh %27 : vector<8x2xf32>
    %cst_30 = arith.constant 1.000000e-01 : f32
    %36 = vector.broadcast %cst_30 : f32 to vector<8x2xf32>
    %37 = arith.mulf %36, %35 : vector<8x2xf32>
    %38 = math.exp %37 : vector<8x2xf32>
    %39 = arith.mulf %2, %38 : vector<8x2xf32>
    %40 = arith.addf %39, %34 : vector<8x2xf32>
    %c1 = arith.constant 1 : index
    %c0_31 = arith.constant 0 : index
    %c0_32 = arith.constant 0 : index
    %41 = vector.load %arg2[%c1, %c0_31, %c0_32] : memref<4x2x2xf32, #tpu.memory_space<vmem>>, vector<1x2x2xf32>
    %42 = vector.shape_cast %41 : vector<1x2x2xf32> to vector<2x2xf32>
    %cst_33 = arith.constant dense<0.000000e+00> : vector<8x2xf32>
    %43 = tpu.matmul %40, %42, %cst_33 {dimension_numbers = #tpu.dot_dimension_numbers<[1], [0], [0], [1], [0, 0, 1, 1], [], []>} : vector<8x2xf32>, vector<2x2xf32>, vector<8x2xf32> -> vector<8x2xf32>
    %c1_34 = arith.constant 1 : index
    %c0_35 = arith.constant 0 : index
    %c0_36 = arith.constant 0 : index
    %44 = vector.load %arg3[%c1_34, %c0_35, %c0_36] : memref<4x1x2xf32, #tpu.memory_space<vmem>>, vector<1x1x2xf32>
    %45 = vector.shape_cast %44 : vector<1x1x2xf32> to vector<1x2xf32>
    %46 = vector.broadcast %45 : vector<1x2xf32> to vector<8x2xf32>
    %47 = arith.addf %43, %46 : vector<8x2xf32>
    %cst_37 = arith.constant 0.000000e+00 : f32
    %48 = vector.broadcast %cst_37 : f32 to vector<8x2xf32>
    %49 = arith.maximumf %47, %48 : vector<8x2xf32>
    %c1_38 = arith.constant 1 : index
    %c0_39 = arith.constant 0 : index
    %c0_40 = arith.constant 0 : index
    %50 = vector.load %arg4[%c1_38, %c0_39, %c0_40] : memref<4x2x2xf32, #tpu.memory_space<vmem>>, vector<1x2x2xf32>
    %51 = vector.shape_cast %50 : vector<1x2x2xf32> to vector<2x2xf32>
    %cst_41 = arith.constant dense<0.000000e+00> : vector<8x2xf32>
    %52 = tpu.matmul %49, %51, %cst_41 {dimension_numbers = #tpu.dot_dimension_numbers<[1], [0], [0], [1], [0, 0, 1, 1], [], []>} : vector<8x2xf32>, vector<2x2xf32>, vector<8x2xf32> -> vector<8x2xf32>
    %c1_42 = arith.constant 1 : index
    %c0_43 = arith.constant 0 : index
    %c0_44 = arith.constant 0 : index
    %53 = vector.load %arg5[%c1_42, %c0_43, %c0_44] : memref<4x1x2xf32, #tpu.memory_space<vmem>>, vector<1x1x2xf32>
    %54 = vector.shape_cast %53 : vector<1x1x2xf32> to vector<1x2xf32>
    %55 = vector.broadcast %54 : vector<1x2xf32> to vector<8x2xf32>
    %56 = arith.addf %52, %55 : vector<8x2xf32>
    %cst_45 = arith.constant 0.000000e+00 : f32
    %57 = vector.broadcast %cst_45 : f32 to vector<8x2xf32>
    %58 = arith.maximumf %56, %57 : vector<8x2xf32>
    %c1_46 = arith.constant 1 : index
    %c0_47 = arith.constant 0 : index
    %c0_48 = arith.constant 0 : index
    %59 = vector.load %arg6[%c1_46, %c0_47, %c0_48] : memref<4x2x2xf32, #tpu.memory_space<vmem>>, vector<1x2x2xf32>
    %60 = vector.shape_cast %59 : vector<1x2x2xf32> to vector<2x2xf32>
    %cst_49 = arith.constant dense<0.000000e+00> : vector<8x2xf32>
    %61 = tpu.matmul %58, %60, %cst_49 {dimension_numbers = #tpu.dot_dimension_numbers<[1], [0], [0], [1], [0, 0, 1, 1], [], []>} : vector<8x2xf32>, vector<2x2xf32>, vector<8x2xf32> -> vector<8x2xf32>
    %c1_50 = arith.constant 1 : index
    %c0_51 = arith.constant 0 : index
    %c0_52 = arith.constant 0 : index
    %62 = vector.load %arg7[%c1_50, %c0_51, %c0_52] : memref<4x1x2xf32, #tpu.memory_space<vmem>>, vector<1x1x2xf32>
    %63 = vector.shape_cast %62 : vector<1x1x2xf32> to vector<1x2xf32>
    %64 = vector.broadcast %63 : vector<1x2xf32> to vector<8x2xf32>
    %65 = arith.addf %61, %64 : vector<8x2xf32>
    %c1_53 = arith.constant 1 : index
    %c0_54 = arith.constant 0 : index
    %c0_55 = arith.constant 0 : index
    %66 = vector.load %arg8[%c1_53, %c0_54, %c0_55] : memref<4x2x2xf32, #tpu.memory_space<vmem>>, vector<1x2x2xf32>
    %67 = vector.shape_cast %66 : vector<1x2x2xf32> to vector<2x2xf32>
    %cst_56 = arith.constant dense<0.000000e+00> : vector<8x2xf32>
    %68 = tpu.matmul %58, %67, %cst_56 {dimension_numbers = #tpu.dot_dimension_numbers<[1], [0], [0], [1], [0, 0, 1, 1], [], []>} : vector<8x2xf32>, vector<2x2xf32>, vector<8x2xf32> -> vector<8x2xf32>
    %c1_57 = arith.constant 1 : index
    %c0_58 = arith.constant 0 : index
    %c0_59 = arith.constant 0 : index
    %69 = vector.load %arg9[%c1_57, %c0_58, %c0_59] : memref<4x1x2xf32, #tpu.memory_space<vmem>>, vector<1x1x2xf32>
    %70 = vector.shape_cast %69 : vector<1x1x2xf32> to vector<1x2xf32>
    %71 = vector.broadcast %70 : vector<1x2xf32> to vector<8x2xf32>
    %72 = arith.addf %68, %71 : vector<8x2xf32>
    %73 = math.tanh %65 : vector<8x2xf32>
    %cst_60 = arith.constant 1.000000e-01 : f32
    %74 = vector.broadcast %cst_60 : f32 to vector<8x2xf32>
    %75 = arith.mulf %74, %73 : vector<8x2xf32>
    %76 = math.exp %75 : vector<8x2xf32>
    %77 = arith.mulf %1, %76 : vector<8x2xf32>
    %78 = arith.addf %77, %72 : vector<8x2xf32>
    %c0_61 = arith.constant 0 : index
    %c0_62 = arith.constant 0 : index
    %c0_63 = arith.constant 0 : index
    %79 = vector.load %arg10[%c0_61, %c0_62, %c0_63] : memref<1x2x2xf32, #tpu.memory_space<vmem>>, vector<1x2x2xf32>
    %80 = vector.shape_cast %79 : vector<1x2x2xf32> to vector<2x2xf32>
    %c0_64 = arith.constant 0 : index
    %c0_65 = arith.constant 0 : index
    %c0_66 = arith.constant 0 : index
    %81 = vector.load %arg11[%c0_64, %c0_65, %c0_66] : memref<1x2x2xf32, #tpu.memory_space<vmem>>, vector<1x2x2xf32>
    %82 = vector.shape_cast %81 : vector<1x2x2xf32> to vector<2x2xf32>
    %c0_67 = arith.constant 0 : index
    %c0_68 = arith.constant 0 : index
    %c0_69 = arith.constant 0 : index
    %83 = vector.load %arg12[%c0_67, %c0_68, %c0_69] : memref<1x2x2xf32, #tpu.memory_space<vmem>>, vector<1x2x2xf32>
    %84 = vector.shape_cast %83 : vector<1x2x2xf32> to vector<2x2xf32>
    %c0_70 = arith.constant 0 : index
    %c0_71 = arith.constant 0 : index
    %c0_72 = arith.constant 0 : index
    %85 = vector.load %arg13[%c0_70, %c0_71, %c0_72] : memref<1x2x2xf32, #tpu.memory_space<vmem>>, vector<1x2x2xf32>
    %86 = vector.shape_cast %85 : vector<1x2x2xf32> to vector<2x2xf32>
    %cst_73 = arith.constant dense<0.000000e+00> : vector<8x2xf32>
    %87 = tpu.matmul %78, %80, %cst_73 {dimension_numbers = #tpu.dot_dimension_numbers<[1], [0], [0], [1], [0, 0, 1, 1], [], []>} : vector<8x2xf32>, vector<2x2xf32>, vector<8x2xf32> -> vector<8x2xf32>
    %cst_74 = arith.constant dense<0.000000e+00> : vector<8x2xf32>
    %88 = tpu.matmul %40, %84, %cst_74 {dimension_numbers = #tpu.dot_dimension_numbers<[1], [0], [0], [1], [0, 0, 1, 1], [], []>} : vector<8x2xf32>, vector<2x2xf32>, vector<8x2xf32> -> vector<8x2xf32>
    %89 = arith.addf %87, %88 : vector<8x2xf32>
    %cst_75 = arith.constant dense<0.000000e+00> : vector<8x2xf32>
    %90 = tpu.matmul %78, %82, %cst_75 {dimension_numbers = #tpu.dot_dimension_numbers<[1], [0], [0], [1], [0, 0, 1, 1], [], []>} : vector<8x2xf32>, vector<2x2xf32>, vector<8x2xf32> -> vector<8x2xf32>
    %cst_76 = arith.constant dense<0.000000e+00> : vector<8x2xf32>
    %91 = tpu.matmul %40, %86, %cst_76 {dimension_numbers = #tpu.dot_dimension_numbers<[1], [0], [0], [1], [0, 0, 1, 1], [], []>} : vector<8x2xf32>, vector<2x2xf32>, vector<8x2xf32> -> vector<8x2xf32>
    %92 = arith.addf %90, %91 : vector<8x2xf32>
    %c2 = arith.constant 2 : index
    %c0_77 = arith.constant 0 : index
    %c0_78 = arith.constant 0 : index
    %93 = vector.load %arg2[%c2, %c0_77, %c0_78] : memref<4x2x2xf32, #tpu.memory_space<vmem>>, vector<1x2x2xf32>
    %94 = vector.shape_cast %93 : vector<1x2x2xf32> to vector<2x2xf32>
    %cst_79 = arith.constant dense<0.000000e+00> : vector<8x2xf32>
    %95 = tpu.matmul %89, %94, %cst_79 {dimension_numbers = #tpu.dot_dimension_numbers<[1], [0], [0], [1], [0, 0, 1, 1], [], []>} : vector<8x2xf32>, vector<2x2xf32>, vector<8x2xf32> -> vector<8x2xf32>
    %c2_80 = arith.constant 2 : index
    %c0_81 = arith.constant 0 : index
    %c0_82 = arith.constant 0 : index
    %96 = vector.load %arg3[%c2_80, %c0_81, %c0_82] : memref<4x1x2xf32, #tpu.memory_space<vmem>>, vector<1x1x2xf32>
    %97 = vector.shape_cast %96 : vector<1x1x2xf32> to vector<1x2xf32>
    %98 = vector.broadcast %97 : vector<1x2xf32> to vector<8x2xf32>
    %99 = arith.addf %95, %98 : vector<8x2xf32>
    %cst_83 = arith.constant 0.000000e+00 : f32
    %100 = vector.broadcast %cst_83 : f32 to vector<8x2xf32>
    %101 = arith.maximumf %99, %100 : vector<8x2xf32>
    %c2_84 = arith.constant 2 : index
    %c0_85 = arith.constant 0 : index
    %c0_86 = arith.constant 0 : index
    %102 = vector.load %arg4[%c2_84, %c0_85, %c0_86] : memref<4x2x2xf32, #tpu.memory_space<vmem>>, vector<1x2x2xf32>
    %103 = vector.shape_cast %102 : vector<1x2x2xf32> to vector<2x2xf32>
    %cst_87 = arith.constant dense<0.000000e+00> : vector<8x2xf32>
    %104 = tpu.matmul %101, %103, %cst_87 {dimension_numbers = #tpu.dot_dimension_numbers<[1], [0], [0], [1], [0, 0, 1, 1], [], []>} : vector<8x2xf32>, vector<2x2xf32>, vector<8x2xf32> -> vector<8x2xf32>
    %c2_88 = arith.constant 2 : index
    %c0_89 = arith.constant 0 : index
    %c0_90 = arith.constant 0 : index
    %105 = vector.load %arg5[%c2_88, %c0_89, %c0_90] : memref<4x1x2xf32, #tpu.memory_space<vmem>>, vector<1x1x2xf32>
    %106 = vector.shape_cast %105 : vector<1x1x2xf32> to vector<1x2xf32>
    %107 = vector.broadcast %106 : vector<1x2xf32> to vector<8x2xf32>
    %108 = arith.addf %104, %107 : vector<8x2xf32>
    %cst_91 = arith.constant 0.000000e+00 : f32
    %109 = vector.broadcast %cst_91 : f32 to vector<8x2xf32>
    %110 = arith.maximumf %108, %109 : vector<8x2xf32>
    %c2_92 = arith.constant 2 : index
    %c0_93 = arith.constant 0 : index
    %c0_94 = arith.constant 0 : index
    %111 = vector.load %arg6[%c2_92, %c0_93, %c0_94] : memref<4x2x2xf32, #tpu.memory_space<vmem>>, vector<1x2x2xf32>
    %112 = vector.shape_cast %111 : vector<1x2x2xf32> to vector<2x2xf32>
    %cst_95 = arith.constant dense<0.000000e+00> : vector<8x2xf32>
    %113 = tpu.matmul %110, %112, %cst_95 {dimension_numbers = #tpu.dot_dimension_numbers<[1], [0], [0], [1], [0, 0, 1, 1], [], []>} : vector<8x2xf32>, vector<2x2xf32>, vector<8x2xf32> -> vector<8x2xf32>
    %c2_96 = arith.constant 2 : index
    %c0_97 = arith.constant 0 : index
    %c0_98 = arith.constant 0 : index
    %114 = vector.load %arg7[%c2_96, %c0_97, %c0_98] : memref<4x1x2xf32, #tpu.memory_space<vmem>>, vector<1x1x2xf32>
    %115 = vector.shape_cast %114 : vector<1x1x2xf32> to vector<1x2xf32>
    %116 = vector.broadcast %115 : vector<1x2xf32> to vector<8x2xf32>
    %117 = arith.addf %113, %116 : vector<8x2xf32>
    %c2_99 = arith.constant 2 : index
    %c0_100 = arith.constant 0 : index
    %c0_101 = arith.constant 0 : index
    %118 = vector.load %arg8[%c2_99, %c0_100, %c0_101] : memref<4x2x2xf32, #tpu.memory_space<vmem>>, vector<1x2x2xf32>
    %119 = vector.shape_cast %118 : vector<1x2x2xf32> to vector<2x2xf32>
    %cst_102 = arith.constant dense<0.000000e+00> : vector<8x2xf32>
    %120 = tpu.matmul %110, %119, %cst_102 {dimension_numbers = #tpu.dot_dimension_numbers<[1], [0], [0], [1], [0, 0, 1, 1], [], []>} : vector<8x2xf32>, vector<2x2xf32>, vector<8x2xf32> -> vector<8x2xf32>
    %c2_103 = arith.constant 2 : index
    %c0_104 = arith.constant 0 : index
    %c0_105 = arith.constant 0 : index
    %121 = vector.load %arg9[%c2_103, %c0_104, %c0_105] : memref<4x1x2xf32, #tpu.memory_space<vmem>>, vector<1x1x2xf32>
    %122 = vector.shape_cast %121 : vector<1x1x2xf32> to vector<1x2xf32>
    %123 = vector.broadcast %122 : vector<1x2xf32> to vector<8x2xf32>
    %124 = arith.addf %120, %123 : vector<8x2xf32>
    %125 = math.tanh %117 : vector<8x2xf32>
    %cst_106 = arith.constant 1.000000e-01 : f32
    %126 = vector.broadcast %cst_106 : f32 to vector<8x2xf32>
    %127 = arith.mulf %126, %125 : vector<8x2xf32>
    %128 = math.exp %127 : vector<8x2xf32>
    %129 = arith.mulf %92, %128 : vector<8x2xf32>
    %130 = arith.addf %129, %124 : vector<8x2xf32>
    %c3 = arith.constant 3 : index
    %c0_107 = arith.constant 0 : index
    %c0_108 = arith.constant 0 : index
    %131 = vector.load %arg2[%c3, %c0_107, %c0_108] : memref<4x2x2xf32, #tpu.memory_space<vmem>>, vector<1x2x2xf32>
    %132 = vector.shape_cast %131 : vector<1x2x2xf32> to vector<2x2xf32>
    %cst_109 = arith.constant dense<0.000000e+00> : vector<8x2xf32>
    %133 = tpu.matmul %130, %132, %cst_109 {dimension_numbers = #tpu.dot_dimension_numbers<[1], [0], [0], [1], [0, 0, 1, 1], [], []>} : vector<8x2xf32>, vector<2x2xf32>, vector<8x2xf32> -> vector<8x2xf32>
    %c3_110 = arith.constant 3 : index
    %c0_111 = arith.constant 0 : index
    %c0_112 = arith.constant 0 : index
    %134 = vector.load %arg3[%c3_110, %c0_111, %c0_112] : memref<4x1x2xf32, #tpu.memory_space<vmem>>, vector<1x1x2xf32>
    %135 = vector.shape_cast %134 : vector<1x1x2xf32> to vector<1x2xf32>
    %136 = vector.broadcast %135 : vector<1x2xf32> to vector<8x2xf32>
    %137 = arith.addf %133, %136 : vector<8x2xf32>
    %cst_113 = arith.constant 0.000000e+00 : f32
    %138 = vector.broadcast %cst_113 : f32 to vector<8x2xf32>
    %139 = arith.maximumf %137, %138 : vector<8x2xf32>
    %c3_114 = arith.constant 3 : index
    %c0_115 = arith.constant 0 : index
    %c0_116 = arith.constant 0 : index
    %140 = vector.load %arg4[%c3_114, %c0_115, %c0_116] : memref<4x2x2xf32, #tpu.memory_space<vmem>>, vector<1x2x2xf32>
    %141 = vector.shape_cast %140 : vector<1x2x2xf32> to vector<2x2xf32>
    %cst_117 = arith.constant dense<0.000000e+00> : vector<8x2xf32>
    %142 = tpu.matmul %139, %141, %cst_117 {dimension_numbers = #tpu.dot_dimension_numbers<[1], [0], [0], [1], [0, 0, 1, 1], [], []>} : vector<8x2xf32>, vector<2x2xf32>, vector<8x2xf32> -> vector<8x2xf32>
    %c3_118 = arith.constant 3 : index
    %c0_119 = arith.constant 0 : index
    %c0_120 = arith.constant 0 : index
    %143 = vector.load %arg5[%c3_118, %c0_119, %c0_120] : memref<4x1x2xf32, #tpu.memory_space<vmem>>, vector<1x1x2xf32>
    %144 = vector.shape_cast %143 : vector<1x1x2xf32> to vector<1x2xf32>
    %145 = vector.broadcast %144 : vector<1x2xf32> to vector<8x2xf32>
    %146 = arith.addf %142, %145 : vector<8x2xf32>
    %cst_121 = arith.constant 0.000000e+00 : f32
    %147 = vector.broadcast %cst_121 : f32 to vector<8x2xf32>
    %148 = arith.maximumf %146, %147 : vector<8x2xf32>
    %c3_122 = arith.constant 3 : index
    %c0_123 = arith.constant 0 : index
    %c0_124 = arith.constant 0 : index
    %149 = vector.load %arg6[%c3_122, %c0_123, %c0_124] : memref<4x2x2xf32, #tpu.memory_space<vmem>>, vector<1x2x2xf32>
    %150 = vector.shape_cast %149 : vector<1x2x2xf32> to vector<2x2xf32>
    %cst_125 = arith.constant dense<0.000000e+00> : vector<8x2xf32>
    %151 = tpu.matmul %148, %150, %cst_125 {dimension_numbers = #tpu.dot_dimension_numbers<[1], [0], [0], [1], [0, 0, 1, 1], [], []>} : vector<8x2xf32>, vector<2x2xf32>, vector<8x2xf32> -> vector<8x2xf32>
    %c3_126 = arith.constant 3 : index
    %c0_127 = arith.constant 0 : index
    %c0_128 = arith.constant 0 : index
    %152 = vector.load %arg7[%c3_126, %c0_127, %c0_128] : memref<4x1x2xf32, #tpu.memory_space<vmem>>, vector<1x1x2xf32>
    %153 = vector.shape_cast %152 : vector<1x1x2xf32> to vector<1x2xf32>
    %154 = vector.broadcast %153 : vector<1x2xf32> to vector<8x2xf32>
    %155 = arith.addf %151, %154 : vector<8x2xf32>
    %c3_129 = arith.constant 3 : index
    %c0_130 = arith.constant 0 : index
    %c0_131 = arith.constant 0 : index
    %156 = vector.load %arg8[%c3_129, %c0_130, %c0_131] : memref<4x2x2xf32, #tpu.memory_space<vmem>>, vector<1x2x2xf32>
    %157 = vector.shape_cast %156 : vector<1x2x2xf32> to vector<2x2xf32>
    %cst_132 = arith.constant dense<0.000000e+00> : vector<8x2xf32>
    %158 = tpu.matmul %148, %157, %cst_132 {dimension_numbers = #tpu.dot_dimension_numbers<[1], [0], [0], [1], [0, 0, 1, 1], [], []>} : vector<8x2xf32>, vector<2x2xf32>, vector<8x2xf32> -> vector<8x2xf32>
    %c3_133 = arith.constant 3 : index
    %c0_134 = arith.constant 0 : index
    %c0_135 = arith.constant 0 : index
    %159 = vector.load %arg9[%c3_133, %c0_134, %c0_135] : memref<4x1x2xf32, #tpu.memory_space<vmem>>, vector<1x1x2xf32>
    %160 = vector.shape_cast %159 : vector<1x1x2xf32> to vector<1x2xf32>
    %161 = vector.broadcast %160 : vector<1x2xf32> to vector<8x2xf32>
    %162 = arith.addf %158, %161 : vector<8x2xf32>
    %163 = math.tanh %155 : vector<8x2xf32>
    %cst_136 = arith.constant 1.000000e-01 : f32
    %164 = vector.broadcast %cst_136 : f32 to vector<8x2xf32>
    %165 = arith.mulf %164, %163 : vector<8x2xf32>
    %166 = math.exp %165 : vector<8x2xf32>
    %167 = arith.mulf %89, %166 : vector<8x2xf32>
    %168 = arith.addf %167, %162 : vector<8x2xf32>
    %169 = tpu.concatenate %168, %130 in 1 : vector<8x2xf32>, vector<8x2xf32> -> vector<8x4xf32>
    %c0_137 = arith.constant 0 : index
    %c0_138 = arith.constant 0 : index
    %170 = vector.load %arg14[%c0_137, %c0_138] : memref<8x4xf32, #tpu.memory_space<vmem>>, vector<8x4xf32>
    tpu.vector_store %arg14[%c0_137, %c0_138], %169 {strides = array<i32>} : memref<8x4xf32, #tpu.memory_space<vmem>>, vector<8x4xf32>,
    return
  }
  func.func @transform_0(%arg0: i32) -> (i32, i32) {
    %c0_i32 = arith.constant 0 : i32
    %c0_i32_0 = arith.constant 0 : i32
    return %arg0, %c0_i32 : i32, i32
  }
  func.func @transform_1(%arg0: i32) -> (i32, i32, i32) {
    %c0_i32 = arith.constant 0 : i32
    %c0_i32_0 = arith.constant 0 : i32
    %c0_i32_1 = arith.constant 0 : i32
    %c0_i32_2 = arith.constant 0 : i32
    return %c0_i32, %c0_i32_0, %c0_i32_1 : i32, i32, i32
  }
  func.func @transform_2(%arg0: i32) -> (i32, i32, i32) {
    %c0_i32 = arith.constant 0 : i32
    %c0_i32_0 = arith.constant 0 : i32
    %c0_i32_1 = arith.constant 0 : i32
    %c0_i32_2 = arith.constant 0 : i32
    return %c0_i32, %c0_i32_0, %c0_i32_1 : i32, i32, i32
  }
  func.func @transform_3(%arg0: i32) -> (i32, i32, i32) {
    %c0_i32 = arith.constant 0 : i32
    %c0_i32_0 = arith.constant 0 : i32
    %c0_i32_1 = arith.constant 0 : i32
    %c0_i32_2 = arith.constant 0 : i32
    return %c0_i32, %c0_i32_0, %c0_i32_1 : i32, i32, i32
  }
  func.func @transform_4(%arg0: i32) -> (i32, i32, i32) {
    %c0_i32 = arith.constant 0 : i32
    %c0_i32_0 = arith.constant 0 : i32
    %c0_i32_1 = arith.constant 0 : i32
    %c0_i32_2 = arith.constant 0 : i32
    return %c0_i32, %c0_i32_0, %c0_i32_1 : i32, i32, i32
  }
  func.func @transform_5(%arg0: i32) -> (i32, i32, i32) {
    %c0_i32 = arith.constant 0 : i32
    %c0_i32_0 = arith.constant 0 : i32
    %c0_i32_1 = arith.constant 0 : i32
    %c0_i32_2 = arith.constant 0 : i32
    return %c0_i32, %c0_i32_0, %c0_i32_1 : i32, i32, i32
  }
  func.func @transform_6(%arg0: i32) -> (i32, i32, i32) {
    %c0_i32 = arith.constant 0 : i32
    %c0_i32_0 = arith.constant 0 : i32
    %c0_i32_1 = arith.constant 0 : i32
    %c0_i32_2 = arith.constant 0 : i32
    return %c0_i32, %c0_i32_0, %c0_i32_1 : i32, i32, i32
  }
  func.func @transform_7(%arg0: i32) -> (i32, i32, i32) {
    %c0_i32 = arith.constant 0 : i32
    %c0_i32_0 = arith.constant 0 : i32
    %c0_i32_1 = arith.constant 0 : i32
    %c0_i32_2 = arith.constant 0 : i32
    return %c0_i32, %c0_i32_0, %c0_i32_1 : i32, i32, i32
  }
  func.func @transform_8(%arg0: i32) -> (i32, i32, i32) {
    %c0_i32 = arith.constant 0 : i32
    %c0_i32_0 = arith.constant 0 : i32
    %c0_i32_1 = arith.constant 0 : i32
    %c0_i32_2 = arith.constant 0 : i32
    return %c0_i32, %c0_i32_0, %c0_i32_1 : i32, i32, i32
  }
  func.func @transform_9(%arg0: i32) -> (i32, i32, i32) {
    %c0_i32 = arith.constant 0 : i32
    %c0_i32_0 = arith.constant 0 : i32
    %c0_i32_1 = arith.constant 0 : i32
    %c0_i32_2 = arith.constant 0 : i32
    return %c0_i32, %c0_i32_0, %c0_i32_1 : i32, i32, i32
  }
  func.func @transform_10(%arg0: i32) -> (i32, i32, i32) {
    %c0_i32 = arith.constant 0 : i32
    %c0_i32_0 = arith.constant 0 : i32
    %c0_i32_1 = arith.constant 0 : i32
    %c0_i32_2 = arith.constant 0 : i32
    return %c0_i32, %c0_i32_0, %c0_i32_1 : i32, i32, i32
  }
  func.func @transform_11(%arg0: i32) -> (i32, i32, i32) {
    %c0_i32 = arith.constant 0 : i32
    %c0_i32_0 = arith.constant 0 : i32
    %c0_i32_1 = arith.constant 0 : i32
    %c0_i32_2 = arith.constant 0 : i32
    return %c0_i32, %c0_i32_0, %c0_i32_1 : i32, i32, i32
  }
  func.func @transform_12(%arg0: i32) -> (i32, i32, i32) {
    %c0_i32 = arith.constant 0 : i32
    %c0_i32_0 = arith.constant 0 : i32
    %c0_i32_1 = arith.constant 0 : i32
    %c0_i32_2 = arith.constant 0 : i32
    return %c0_i32, %c0_i32_0, %c0_i32_1 : i32, i32, i32
  }
  func.func @transform_13(%arg0: i32) -> (i32, i32) {
    %c0_i32 = arith.constant 0 : i32
    %c0_i32_0 = arith.constant 0 : i32
    return %arg0, %c0_i32 : i32, i32
  }
}

</mosaic_0001>

<llo_original>
// kernel: tpu_custom_call.1
$region0: #{tpu_custom_call.1}
  #allocation0 [shape = 'u32[]', space=smem, size = 0x4, offset = 0x4, fixed_abs, tag = 'smem constant byte address 0x4 - core index']
  #allocation1 [shape = 'u32[144,128]{1,0:T(1,128)}', space=vmem, size = 0x12000, scoped, tag = 'internal scratch']
  %s0 = inlined_call_operand.vmem [shape: f32[16,4], index: 0, kind: input, shape index: {}]
  %s1 = inlined_call_operand.vmem [shape: f32[4,2,2], index: 1, kind: input, shape index: {}]
  %s2 = inlined_call_operand.vmem [shape: f32[4,1,2], index: 2, kind: input, shape index: {}]
  %s3 = inlined_call_operand.vmem [shape: f32[4,2,2], index: 3, kind: input, shape index: {}]
  %s4 = inlined_call_operand.vmem [shape: f32[4,1,2], index: 4, kind: input, shape index: {}]
  %s5 = inlined_call_operand.vmem [shape: f32[4,2,2], index: 5, kind: input, shape index: {}]
  %s6 = inlined_call_operand.vmem [shape: f32[4,1,2], index: 6, kind: input, shape index: {}]
  %s7 = inlined_call_operand.vmem [shape: f32[4,2,2], index: 7, kind: input, shape index: {}]
  %s8 = inlined_call_operand.vmem [shape: f32[4,1,2], index: 8, kind: input, shape index: {}]
  %s9 = inlined_call_operand.vmem [shape: f32[1,2,2], index: 9, kind: input, shape index: {}]
  %s10 = inlined_call_operand.vmem [shape: f32[1,2,2], index: 10, kind: input, shape index: {}]
  %s11 = inlined_call_operand.vmem [shape: f32[1,2,2], index: 11, kind: input, shape index: {}]
  %s12 = inlined_call_operand.vmem [shape: f32[1,2,2], index: 12, kind: input, shape index: {}]
  %s13 = inlined_call_operand.vmem [shape: f32[16,4], index: 13, kind: output, shape index: {}]
  %s14 = sld [smem:[#allocation0]]
  $region85: #{tpu_custom_call.1} parent=0
    _
  %s16 = ssub.s32 1, %s14
  %s17 = scalar_select 0, %s16, %s14
  loop: start=0, step=1, limit=4
  $region2: #{tpu_custom_call.1} parent=0 // loop_pre_header
    _
  $region3: #{tpu_custom_call.1} parent=0 // loop_header
    %s19 = sphi 0, %s23
    %p20 = scmp.ge.s32.totalorder %s19, 4
    %s29 = sphi 0, %s31
    %s32 = sphi 0, %s29
    %s33 = sphi 0, %s32
    %s49 = sphi 0, %s33
    %s53 = sphi 0, %s53
    %s55 = sphi 0, %s53
    %s56 = sphi 0, %s55
    %s70 = sphi 0, %s56
    %s74 = sphi 0, %s74
    %s76 = sphi 0, %s74
    %s77 = sphi 0, %s76
    %s91 = sphi 0, %s77
    %s95 = sphi 0, %s95
    %s97 = sphi 0, %s95
    %s98 = sphi 0, %s97
    %s112 = sphi 0, %s98
    %s116 = sphi 0, %s116
    %s118 = sphi 0, %s116
    %s119 = sphi 0, %s118
    %s133 = sphi 0, %s119
    %s137 = sphi 0, %s137
    %s139 = sphi 0, %s137
    %s140 = sphi 0, %s139
    %s154 = sphi 0, %s140
    %s158 = sphi 0, %s158
    %s160 = sphi 0, %s158
    %s161 = sphi 0, %s160
    %s175 = sphi 0, %s161
    %s179 = sphi 0, %s179
    %s181 = sphi 0, %s179
    %s182 = sphi 0, %s181
    %s196 = sphi 0, %s182
    %s200 = sphi 0, %s200
    %s202 = sphi 0, %s200
    %s203 = sphi 0, %s202
    %s217 = sphi 0, %s203
    %s221 = sphi 0, %s221
    %s223 = sphi 0, %s221
    %s224 = sphi 0, %s223
    %s238 = sphi 0, %s224
    %s242 = sphi 0, %s242
    %s244 = sphi 0, %s242
    %s245 = sphi 0, %s244
    %s259 = sphi 0, %s245
    %s263 = sphi 0, %s263
    %s265 = sphi 0, %s263
    %s266 = sphi 0, %s265
    %s280 = sphi 0, %s266
    %s284 = sphi 0, %s284
    %s286 = sphi 0, %s284
    %s287 = sphi 0, %s286
    %s301 = sphi 0, %s287
    %s307 = sphi 0, %s309
    %s310 = sphi 0, %s307
    %s311 = sphi 0, %s310
    %s327 = sphi 0, %s311
  $region4: #{tpu_custom_call.1} parent=0 // loop_header_branch
    %22 = sbr.rel (%p20) target = $region8
  $region5: #{tpu_custom_call.1} parent=0 // loop_body
    %s24 = ssub.s32 %s19, 1
    %s25 = ssub.s32 %s19, 2
    %s26 = sadd.s32 %s19, 1
    %s27 = ssub.s32 %s19, %s26
    %p28 = scmp.eq.s32.totalorder %s27, 0
    %s30 = sadd.s32 %s29, 1
    %s31 = scalar_select %p28, %s29, %s30
    %p34 = pneg %p28
    %p35 = scmp.eq.s32.totalorder %s19, 1
    %p36 = por %p34, %p35
    %p37 = scmp.ne.s32.totalorder %s29, %s32
    %p38 = scmp.eq.s32.totalorder %s19, 0
    %p39 = por %p37, %p38
    %p40 = scmp.ne.s32.totalorder %s29, %s32
    %p41 = scmp.eq.s32.totalorder %s24, 1
    %p42 = por %p40, %p41
    %p43 = scmp.ne.s32.totalorder %s32, %s33
    %p44 = scmp.eq.s32.totalorder %s24, 0
    %p45 = por %p43, %p44
    %p46 = scmp.ne.s32.totalorder %s32, %s33
    %p47 = scmp.eq.s32.totalorder %s25, 1
    %p48 = por %p46, %p47
    %p50 = scmp.ne.s32.totalorder %s33, %s49
    %p51 = scmp.eq.s32.totalorder %s25, 0
    %p52 = por %p50, %p51
    %s54 = sadd.s32 %s53, 1
    %p57 = scmp.eq.s32.totalorder %s19, 1
    %p58 = scmp.ne.s32.totalorder %s53, %s55
    %p59 = scmp.eq.s32.totalorder %s19, 0
    %p60 = por %p58, %p59
    %p61 = scmp.ne.s32.totalorder %s53, %s55
    %p62 = scmp.eq.s32.totalorder %s24, 1
    %p63 = por %p61, %p62
    %p64 = scmp.ne.s32.totalorder %s55, %s56
    %p65 = scmp.eq.s32.totalorder %s24, 0
    %p66 = por %p64, %p65
    %p67 = scmp.ne.s32.totalorder %s55, %s56
    %p68 = scmp.eq.s32.totalorder %s25, 1
    %p69 = por %p67, %p68
    %p71 = scmp.ne.s32.totalorder %s56, %s70
    %p72 = scmp.eq.s32.totalorder %s25, 0
    %p73 = por %p71, %p72
    %s75 = sadd.s32 %s74, 1
    %p78 = scmp.eq.s32.totalorder %s19, 1
    %p79 = scmp.ne.s32.totalorder %s74, %s76
    %p80 = scmp.eq.s32.totalorder %s19, 0
    %p81 = por %p79, %p80
    %p82 = scmp.ne.s32.totalorder %s74, %s76
    %p83 = scmp.eq.s32.totalorder %s24, 1
    %p84 = por %p82, %p83
    %p85 = scmp.ne.s32.totalorder %s76, %s77
    %p86 = scmp.eq.s32.totalorder %s24, 0
    %p87 = por %p85, %p86
    %p88 = scmp.ne.s32.totalorder %s76, %s77
    %p89 = scmp.eq.s32.totalorder %s25, 1
    %p90 = por %p88, %p89
    %p92 = scmp.ne.s32.totalorder %s77, %s91
    %p93 = scmp.eq.s32.totalorder %s25, 0
    %p94 = por %p92, %p93
    %s96 = sadd.s32 %s95, 1
    %p99 = scmp.eq.s32.totalorder %s19, 1
    %p100 = scmp.ne.s32.totalorder %s95, %s97
    %p101 = scmp.eq.s32.totalorder %s19, 0
    %p102 = por %p100, %p101
    %p103 = scmp.ne.s32.totalorder %s95, %s97
    %p104 = scmp.eq.s32.totalorder %s24, 1
    %p105 = por %p103, %p104
    %p106 = scmp.ne.s32.totalorder %s97, %s98
    %p107 = scmp.eq.s32.totalorder %s24, 0
    %p108 = por %p106, %p107
    %p109 = scmp.ne.s32.totalorder %s97, %s98
    %p110 = scmp.eq.s32.totalorder %s25, 1
    %p111 = por %p109, %p110
    %p113 = scmp.ne.s32.totalorder %s98, %s112
    %p114 = scmp.eq.s32.totalorder %s25, 0
    %p115 = por %p113, %p114
    %s117 = sadd.s32 %s116, 1
    %p120 = scmp.eq.s32.totalorder %s19, 1
    %p121 = scmp.ne.s32.totalorder %s116, %s118
    %p122 = scmp.eq.s32.totalorder %s19, 0
    %p123 = por %p121, %p122
    %p124 = scmp.ne.s32.totalorder %s116, %s118
    %p125 = scmp.eq.s32.totalorder %s24, 1
    %p126 = por %p124, %p125
    %p127 = scmp.ne.s32.totalorder %s118, %s119
    %p128 = scmp.eq.s32.totalorder %s24, 0
    %p129 = por %p127, %p128
    %p130 = scmp.ne.s32.totalorder %s118, %s119
    %p131 = scmp.eq.s32.totalorder %s25, 1
    %p132 = por %p130, %p131
    %p134 = scmp.ne.s32.totalorder %s119, %s133
    %p135 = scmp.eq.s32.totalorder %s25, 0
    %p136 = por %p134, %p135
    %s138 = sadd.s32 %s137, 1
    %p141 = scmp.eq.s32.totalorder %s19, 1
    %p142 = scmp.ne.s32.totalorder %s137, %s139
    %p143 = scmp.eq.s32.totalorder %s19, 0
    %p144 = por %p142, %p143
    %p145 = scmp.ne.s32.totalorder %s137, %s139
    %p146 = scmp.eq.s32.totalorder %s24, 1
    %p147 = por %p145, %p146
    %p148 = scmp.ne.s32.totalorder %s139, %s140
    %p149 = scmp.eq.s32.totalorder %s24, 0
    %p150 = por %p148, %p149
    %p151 = scmp.ne.s32.totalorder %s139, %s140
    %p152 = scmp.eq.s32.totalorder %s25, 1
    %p153 = por %p151, %p152
    %p155 = scmp.ne.s32.totalorder %s140, %s154
    %p156 = scmp.eq.s32.totalorder %s25, 0
    %p157 = por %p155, %p156
    %s159 = sadd.s32 %s158, 1
    %p162 = scmp.eq.s32.totalorder %s19, 1
    %p163 = scmp.ne.s32.totalorder %s158, %s160
    %p164 = scmp.eq.s32.totalorder %s19, 0
    %p165 = por %p163, %p164
    %p166 = scmp.ne.s32.totalorder %s158, %s160
    %p167 = scmp.eq.s32.totalorder %s24, 1
    %p168 = por %p166, %p167
    %p169 = scmp.ne.s32.totalorder %s160, %s161
    %p170 = scmp.eq.s32.totalorder %s24, 0
    %p171 = por %p169, %p170
    %p172 = scmp.ne.s32.totalorder %s160, %s161
    %p173 = scmp.eq.s32.totalorder %s25, 1
    %p174 = por %p172, %p173
    %p176 = scmp.ne.s32.totalorder %s161, %s175
    %p177 = scmp.eq.s32.totalorder %s25, 0
    %p178 = por %p176, %p177
    %s180 = sadd.s32 %s179, 1
    %p183 = scmp.eq.s32.totalorder %s19, 1
    %p184 = scmp.ne.s32.totalorder %s179, %s181
    %p185 = scmp.eq.s32.totalorder %s19, 0
    %p186 = por %p184, %p185
    %p187 = scmp.ne.s32.totalorder %s179, %s181
    %p188 = scmp.eq.s32.totalorder %s24, 1
    %p189 = por %p187, %p188
    %p190 = scmp.ne.s32.totalorder %s181, %s182
    %p191 = scmp.eq.s32.totalorder %s24, 0
    %p192 = por %p190, %p191
    %p193 = scmp.ne.s32.totalorder %s181, %s182
    %p194 = scmp.eq.s32.totalorder %s25, 1
    %p195 = por %p193, %p194
    %p197 = scmp.ne.s32.totalorder %s182, %s196
    %p198 = scmp.eq.s32.totalorder %s25, 0
    %p199 = por %p197, %p198
    %s201 = sadd.s32 %s200, 1
    %p204 = scmp.eq.s32.totalorder %s19, 1
    %p205 = scmp.ne.s32.totalorder %s200, %s202
    %p206 = scmp.eq.s32.totalorder %s19, 0
    %p207 = por %p205, %p206
    %p208 = scmp.ne.s32.totalorder %s200, %s202
    %p209 = scmp.eq.s32.totalorder %s24, 1
    %p210 = por %p208, %p209
    %p211 = scmp.ne.s32.totalorder %s202, %s203
    %p212 = scmp.eq.s32.totalorder %s24, 0
    %p213 = por %p211, %p212
    %p214 = scmp.ne.s32.totalorder %s202, %s203
    %p215 = scmp.eq.s32.totalorder %s25, 1
    %p216 = por %p214, %p215
    %p218 = scmp.ne.s32.totalorder %s203, %s217
    %p219 = scmp.eq.s32.totalorder %s25, 0
    %p220 = por %p218, %p219
    %s222 = sadd.s32 %s221, 1
    %p225 = scmp.eq.s32.totalorder %s19, 1
    %p226 = scmp.ne.s32.totalorder %s221, %s223
    %p227 = scmp.eq.s32.totalorder %s19, 0
    %p228 = por %p226, %p227
    %p229 = scmp.ne.s32.totalorder %s221, %s223
    %p230 = scmp.eq.s32.totalorder %s24, 1
    %p231 = por %p229, %p230
    %p232 = scmp.ne.s32.totalorder %s223, %s224
    %p233 = scmp.eq.s32.totalorder %s24, 0
    %p234 = por %p232, %p233
    %p235 = scmp.ne.s32.totalorder %s223, %s224
    %p236 = scmp.eq.s32.totalorder %s25, 1
    %p237 = por %p235, %p236
    %p239 = scmp.ne.s32.totalorder %s224, %s238
    %p240 = scmp.eq.s32.totalorder %s25, 0
    %p241 = por %p239, %p240
    %s243 = sadd.s32 %s242, 1
    %p246 = scmp.eq.s32.totalorder %s19, 1
    %p247 = scmp.ne.s32.totalorder %s242, %s244
    %p248 = scmp.eq.s32.totalorder %s19, 0
    %p249 = por %p247, %p248
    %p250 = scmp.ne.s32.totalorder %s242, %s244
    %p251 = scmp.eq.s32.totalorder %s24, 1
    %p252 = por %p250, %p251
    %p253 = scmp.ne.s32.totalorder %s244, %s245
    %p254 = scmp.eq.s32.totalorder %s24, 0
    %p255 = por %p253, %p254
    %p256 = scmp.ne.s32.totalorder %s244, %s245
    %p257 = scmp.eq.s32.totalorder %s25, 1
    %p258 = por %p256, %p257
    %p260 = scmp.ne.s32.totalorder %s245, %s259
    %p261 = scmp.eq.s32.totalorder %s25, 0
    %p262 = por %p260, %p261
    %s264 = sadd.s32 %s263, 1
    %p267 = scmp.eq.s32.totalorder %s19, 1
    %p268 = scmp.ne.s32.totalorder %s263, %s265
    %p269 = scmp.eq.s32.totalorder %s19, 0
    %p270 = por %p268, %p269
    %p271 = scmp.ne.s32.totalorder %s263, %s265
    %p272 = scmp.eq.s32.totalorder %s24, 1
    %p273 = por %p271, %p272
    %p274 = scmp.ne.s32.totalorder %s265, %s266
    %p275 = scmp.eq.s32.totalorder %s24, 0
    %p276 = por %p274, %p275
    %p277 = scmp.ne.s32.totalorder %s265, %s266
    %p278 = scmp.eq.s32.totalorder %s25, 1
    %p279 = por %p277, %p278
    %p281 = scmp.ne.s32.totalorder %s266, %s280
    %p282 = scmp.eq.s32.totalorder %s25, 0
    %p283 = por %p281, %p282
    %s285 = sadd.s32 %s284, 1
    %p288 = scmp.eq.s32.totalorder %s19, 1
    %p289 = scmp.ne.s32.totalorder %s284, %s286
    %p290 = scmp.eq.s32.totalorder %s19, 0
    %p291 = por %p289, %p290
    %p292 = scmp.ne.s32.totalorder %s284, %s286
    %p293 = scmp.eq.s32.totalorder %s24, 1
    %p294 = por %p292, %p293
    %p295 = scmp.ne.s32.totalorder %s286, %s287
    %p296 = scmp.eq.s32.totalorder %s24, 0
    %p297 = por %p295, %p296
    %p298 = scmp.ne.s32.totalorder %s286, %s287
    %p299 = scmp.eq.s32.totalorder %s25, 1
    %p300 = por %p298, %p299
    %p302 = scmp.ne.s32.totalorder %s287, %s301
    %p303 = scmp.eq.s32.totalorder %s25, 0
    %p304 = por %p302, %p303
    %s305 = ssub.s32 %s19, %s26
    %p306 = scmp.eq.s32.totalorder %s305, 0
    %s308 = sadd.s32 %s307, 1
    %s309 = scalar_select %p306, %s307, %s308
    %p312 = pneg %p306
    %p313 = scmp.eq.s32.totalorder %s19, 1
    %p314 = por %p312, %p313
    %p315 = scmp.ne.s32.totalorder %s307, %s310
    %p316 = scmp.eq.s32.totalorder %s19, 0
    %p317 = por %p315, %p316
    %p318 = scmp.ne.s32.totalorder %s307, %s310
    %p319 = scmp.eq.s32.totalorder %s24, 1
    %p320 = por %p318, %p319
    %p321 = scmp.ne.s32.totalorder %s310, %s311
    %p322 = scmp.eq.s32.totalorder %s24, 0
    %p323 = por %p321, %p322
    %p324 = scmp.ne.s32.totalorder %s310, %s311
    %p325 = scmp.eq.s32.totalorder %s25, 1
    %p326 = por %p324, %p325
    %p328 = scmp.ne.s32.totalorder %s311, %s327
    %p329 = scmp.eq.s32.totalorder %s25, 0
    %p330 = por %p328, %p329
    %p331 = scmp.le.s32.totalorder 1, %s19
    %p332 = scmp.lt.s32.totalorder %s19, 3
    %p333 = pnand %p331, %p332
    %p334 = pneg %p333
    // Predicated region
    $region9: #{tpu_custom_call.1} parent=5 // pred_check
      _
    $region10: #{tpu_custom_call.1} parent=5 // pred_check_branch
      %336 = sbr.rel (%p333) target = $region12
    $region11: #{tpu_custom_call.1} parent=5 // pred_region
      %s337 = ssub.s32 %s19, 1
      // Predicated region
      $region13: #{tpu_custom_call.1} parent=11 // pred_check
        %p338 = pneg %p66
      $region14: #{tpu_custom_call.1} parent=11 // pred_check_branch
        %340 = sbr.rel (%p338) target = $region16
      $region15: #{tpu_custom_call.1} parent=11 // pred_region
        _
      $region16: #{tpu_custom_call.1} parent=11 // pred_fallthru
        _
      // Predicated region
      $region17: #{tpu_custom_call.1} parent=11 // pred_check
        %p341 = pneg %p87
      $region18: #{tpu_custom_call.1} parent=11 // pred_check_branch
        %343 = sbr.rel (%p341) target = $region20
      $region19: #{tpu_custom_call.1} parent=11 // pred_region
        _
      $region20: #{tpu_custom_call.1} parent=11 // pred_fallthru
        _
      // Predicated region
      $region21: #{tpu_custom_call.1} parent=11 // pred_check
        %p344 = pneg %p108
      $region22: #{tpu_custom_call.1} parent=11 // pred_check_branch
        %346 = sbr.rel (%p344) target = $region24
      $region23: #{tpu_custom_call.1} parent=11 // pred_region
        _
      $region24: #{tpu_custom_call.1} parent=11 // pred_fallthru
        _
      // Predicated region
      $region25: #{tpu_custom_call.1} parent=11 // pred_check
        %p347 = pneg %p129
      $region26: #{tpu_custom_call.1} parent=11 // pred_check_branch
        %349 = sbr.rel (%p347) target = $region28
      $region27: #{tpu_custom_call.1} parent=11 // pred_region
        _
      $region28: #{tpu_custom_call.1} parent=11 // pred_fallthru
        _
      // Predicated region
      $region29: #{tpu_custom_call.1} parent=11 // pred_check
        %p350 = pneg %p150
      $region30: #{tpu_custom_call.1} parent=11 // pred_check_branch
        %352 = sbr.rel (%p350) target = $region32
      $region31: #{tpu_custom_call.1} parent=11 // pred_region
        _
      $region32: #{tpu_custom_call.1} parent=11 // pred_fallthru
        _
      // Predicated region
      $region33: #{tpu_custom_call.1} parent=11 // pred_check
        %p353 = pneg %p171
      $region34: #{tpu_custom_call.1} parent=11 // pred_check_branch
        %355 = sbr.rel (%p353) target = $region36
      $region35: #{tpu_custom_call.1} parent=11 // pred_region
        _
      $region36: #{tpu_custom_call.1} parent=11 // pred_fallthru
        _
      // Predicated region
      $region37: #{tpu_custom_call.1} parent=11 // pred_check
        %p356 = pneg %p192
      $region38: #{tpu_custom_call.1} parent=11 // pred_check_branch
        %358 = sbr.rel (%p356) target = $region40
      $region39: #{tpu_custom_call.1} parent=11 // pred_region
        _
      $region40: #{tpu_custom_call.1} parent=11 // pred_fallthru
        _
      // Predicated region
      $region41: #{tpu_custom_call.1} parent=11 // pred_check
        %p359 = pneg %p213
      $region42: #{tpu_custom_call.1} parent=11 // pred_check_branch
        %361 = sbr.rel (%p359) target = $region44
      $region43: #{tpu_custom_call.1} parent=11 // pred_region
        _
      $region44: #{tpu_custom_call.1} parent=11 // pred_fallthru
        _
      // Predicated region
      $region45: #{tpu_custom_call.1} parent=11 // pred_check
        %p362 = pneg %p234
      $region46: #{tpu_custom_call.1} parent=11 // pred_check_branch
        %364 = sbr.rel (%p362) target = $region48
      $region47: #{tpu_custom_call.1} parent=11 // pred_region
        _
      $region48: #{tpu_custom_call.1} parent=11 // pred_fallthru
        _
      // Predicated region
      $region49: #{tpu_custom_call.1} parent=11 // pred_check
        %p365 = pneg %p255
      $region50: #{tpu_custom_call.1} parent=11 // pred_check_branch
        %367 = sbr.rel (%p365) target = $region52
      $region51: #{tpu_custom_call.1} parent=11 // pred_region
        _
      $region52: #{tpu_custom_call.1} parent=11 // pred_fallthru
        _
      // Predicated region
      $region53: #{tpu_custom_call.1} parent=11 // pred_check
        %p368 = pneg %p276
      $region54: #{tpu_custom_call.1} parent=11 // pred_check_branch
        %370 = sbr.rel (%p368) target = $region56
      $region55: #{tpu_custom_call.1} parent=11 // pred_region
        _
      $region56: #{tpu_custom_call.1} parent=11 // pred_fallthru
        _
      // Predicated region
      $region57: #{tpu_custom_call.1} parent=11 // pred_check
        %p371 = pneg %p297
      $region58: #{tpu_custom_call.1} parent=11 // pred_check_branch
        %373 = sbr.rel (%p371) target = $region60
      $region59: #{tpu_custom_call.1} parent=11 // pred_region
        _
      $region60: #{tpu_custom_call.1} parent=11 // pred_fallthru
        _
    $region12: #{tpu_custom_call.1} parent=5 // pred_fallthru
      _
    %p374 = scmp.lt.s32.totalorder %s19, 2
    // Predicated region
    $region61: #{tpu_custom_call.1} parent=5 // pred_check
      %p375 = pneg %p374
    $region62: #{tpu_custom_call.1} parent=5 // pred_check_branch
      %377 = sbr.rel (%p375) target = $region64
    $region63: #{tpu_custom_call.1} parent=5 // pred_region
      // Predicated region
      $region65: #{tpu_custom_call.1} parent=63 // pred_check
        %p378 = pneg %p39
      $region66: #{tpu_custom_call.1} parent=63 // pred_check_branch
        %380 = sbr.rel (%p378) target = $region68
      $region67: #{tpu_custom_call.1} parent=63 // pred_region
        %p381 = scmp.lt.s32.totalorder %s19, 1
        %s382 = scalar_select %p381, %s19, 1
        %s383 = smul.addr %s382, 8
        %s384 = scalar_lea.vmem %s0, %s383
      $region68: #{tpu_custom_call.1} parent=63 // pred_fallthru
        _
    $region64: #{tpu_custom_call.1} parent=5 // pred_fallthru
      _
    %p385 = scmp.le.s32.totalorder 1, %s19
    %p386 = scmp.lt.s32.totalorder %s19, 3
    %p387 = pnand %p385, %p386
    %p388 = pneg %p387
    // Predicated region
    $region69: #{tpu_custom_call.1} parent=5 // pred_check
      _
    $region70: #{tpu_custom_call.1} parent=5 // pred_check_branch
      %390 = sbr.rel (%p387) target = $region72
    $region71: #{tpu_custom_call.1} parent=5 // pred_region
      %s391 = ssub.s32 %s19, 1
      %p392 = scmp.lt.s32.totalorder %s24, 1
      %s393 = scalar_select %p392, %s24, 1
      %s394 = smul.addr %s393, 8
      %s395 = scalar_lea.vmem %s0, %s394
      %p396 = pneg %p45
      %p397 = pneg %p42
      %p398 = pneg %p66
      %p399 = pneg %p63
      %p400 = pneg %p87
      %p401 = pneg %p84
      %p402 = pneg %p108
      %p403 = pneg %p105
      %p404 = pneg %p129
      %p405 = pneg %p126
      %p406 = pneg %p150
      %p407 = pneg %p147
      %p408 = pneg %p171
      %p409 = pneg %p168
      %p410 = pneg %p192
      %p411 = pneg %p189
      %p412 = pneg %p213
      %p413 = pneg %p210
      %p414 = pneg %p234
      %p415 = pneg %p231
      %p416 = pneg %p255
      %p417 = pneg %p252
      %p418 = pneg %p276
      %p419 = pneg %p273
      %p420 = pneg %p297
      %p421 = pneg %p294
      %p422 = pneg %p323
      %p423 = pneg %p320
      %p424 = scmp.lt.s32.totalorder %s24, 1
      %s425 = scalar_select %p424, %s24, 1
      %s426 = smul.addr %s425, 8
      %s427 = scalar_lea.vmem %s13, %s426
      %p428 = scmp.lt.s32.totalorder %s24, 1
      %s429 = scalar_select %p428, %s24, 1
      %s430 = smul.addr %s429, 8
      %s431 = scalar_lea.vmem %s0, %s430
      %p432 = scmp.lt.s32.totalorder %s24, 1
      %s433 = scalar_select %p432, %s24, 1
      %s434 = smul.addr %s433, 8
      %s435 = scalar_lea.vmem %s13, %s434
      %v436 = vld [vmem:[%s431] sm:$0xff]
      %v437 = vld [vmem:[%s1] sm:$0x3]
      %v438 = vld [vmem:[%s2] sm:$0x1]
      %v440 = vlaneseq
      %v441 = vshrl.u32 %v440, 7
      %v442 = vsub.s32 0, %v441
      %v443 = vrot.slane %v438, %v442
      %vm445 = vcmask 15360
      %v447 = vsel %vm445, %v436, 0
      %vm449 = vcmask 1041408
      %v451 = vsel %vm449, %v437, 0
      %453 = vmatprep.subr.mxu0 0.0
      %454 = vmatpush1.msra.mxu0 %v451
      %455 = vmatprep.subr.mxu0 0.0
      %456 = vmatpush1.msra.mxu0 0.0
      %457 = vmatprep.subr.mxu0 0.0
      %458 = vmatpush1.msra.mxu0 0.0
      %459 = vmatprep.subr.mxu0 0.0
      %460 = vmatpush1.msra.mxu0 0.0
      %461 = vmatprep.subr.mxu0 0.0
      %462 = vmatpush1.msra.mxu0 0.0
      %463 = vmatprep.subr.mxu0 0.0
      %464 = vmatpush1.msra.mxu0 0.0
      %465 = vmatprep.subr.mxu0 0.0
      %466 = vmatpush1.msra.mxu0 0.0
      %467 = vmatprep.subr.mxu0 0.0
      %468 = vmatpush1.msra.mxu0 0.0
      %469 = vmatprep.subr.mxu0 0.0
      %470 = vmatpush1.msra.mxu0 0.0
      %471 = vmatprep.subr.mxu0 0.0
      %472 = vmatpush1.msra.mxu0 0.0
      %473 = vmatprep.subr.mxu0 0.0
      %474 = vmatpush1.msra.mxu0 0.0
      %475 = vmatprep.subr.mxu0 0.0
      %476 = vmatpush1.msra.mxu0 0.0
      %477 = vmatprep.subr.mxu0 0.0
      %478 = vmatpush1.msra.mxu0 0.0
      %479 = vmatprep.subr.mxu0 0.0
      %480 = vmatpush1.msra.mxu0 0.0
      %481 = vmatprep.subr.mxu0 0.0
      %482 = vmatpush1.msra.mxu0 0.0
      %483 = vmatprep.subr.mxu0 0.0
      %484 = vmatpush1.msra.mxu0 0.0
      %485 = vmatprep.subr.mxu0 0.0
      %486 = vmatpush1.msra.mxu0 0.0
      %487 = vmatprep.subr.mxu0 0.0
      %488 = vmatpush1.msra.mxu0 0.0
      %489 = vmatprep.subr.mxu0 0.0
      %490 = vmatpush1.msra.mxu0 0.0
      %491 = vmatprep.subr.mxu0 0.0
      %492 = vmatpush1.msra.mxu0 0.0
      %493 = vmatprep.subr.mxu0 0.0
      %494 = vmatpush1.msra.mxu0 0.0
      %495 = vmatprep.subr.mxu0 0.0
      %496 = vmatpush1.msra.mxu0 0.0
      %497 = vmatprep.subr.mxu0 0.0
      %498 = vmatpush1.msra.mxu0 0.0
      %499 = vmatprep.subr.mxu0 0.0
      %500 = vmatpush1.msra.mxu0 0.0
      %501 = vmatprep.subr.mxu0 0.0
      %502 = vmatpush1.msra.mxu0 0.0
      %503 = vmatprep.subr.mxu0 0.0
      %504 = vmatpush1.msra.mxu0 0.0
      %505 = vmatprep.subr.mxu0 0.0
      %506 = vmatpush1.msra.mxu0 0.0
      %507 = vmatprep.subr.mxu0 0.0
      %508 = vmatpush1.msra.mxu0 0.0
      %509 = vmatprep.subr.mxu0 0.0
      %510 = vmatpush1.msra.mxu0 0.0
      %511 = vmatprep.subr.mxu0 0.0
      %512 = vmatpush1.msra.mxu0 0.0
      %513 = vmatprep.subr.mxu0 0.0
      %514 = vmatpush1.msra.mxu0 0.0
      %515 = vmatprep.subr.mxu0 0.0
      %516 = vmatpush1.msra.mxu0 0.0
      %517 = vmatprep.mubr.f32.mxu0 0.0
      %518 = vmatmul.mubr.f32.gmra.mrb[0].mxu0 %v447
      %v519 = vpop.f32.mrb[0].mxu0
      %v520 = vadd.f32 %v443, %v519
      %v521 = vpop.f32.mrb[0].mxu0
      %522 = vdwg.mxu0
      %v523 = vmax.f32 %v520, 0.0
      %v524 = vld [vmem:[%s3] sm:$0x3]
      %v525 = vld [vmem:[%s4] sm:$0x1]
      %v527 = vlaneseq
      %v528 = vshrl.u32 %v527, 7
      %v529 = vsub.s32 0, %v528
      %v530 = vrot.slane %v525, %v529
      %v533 = vsel %vm445, %v523, 0
      %v536 = vsel %vm449, %v524, 0
      %538 = vmatprep.subr.mxu0 0.0
      %539 = vmatpush1.msra.mxu0 %v536
      %540 = vmatprep.subr.mxu0 0.0
      %541 = vmatpush1.msra.mxu0 0.0
      %542 = vmatprep.subr.mxu0 0.0
      %543 = vmatpush1.msra.mxu0 0.0
      %544 = vmatprep.subr.mxu0 0.0
      %545 = vmatpush1.msra.mxu0 0.0
      %546 = vmatprep.subr.mxu0 0.0
      %547 = vmatpush1.msra.mxu0 0.0
      %548 = vmatprep.subr.mxu0 0.0
      %549 = vmatpush1.msra.mxu0 0.0
      %550 = vmatprep.subr.mxu0 0.0
      %551 = vmatpush1.msra.mxu0 0.0
      %552 = vmatprep.subr.mxu0 0.0
      %553 = vmatpush1.msra.mxu0 0.0
      %554 = vmatprep.subr.mxu0 0.0
      %555 = vmatpush1.msra.mxu0 0.0
      %556 = vmatprep.subr.mxu0 0.0
      %557 = vmatpush1.msra.mxu0 0.0
      %558 = vmatprep.subr.mxu0 0.0
      %559 = vmatpush1.msra.mxu0 0.0
      %560 = vmatprep.subr.mxu0 0.0
      %561 = vmatpush1.msra.mxu0 0.0
      %562 = vmatprep.subr.mxu0 0.0
      %563 = vmatpush1.msra.mxu0 0.0
      %564 = vmatprep.subr.mxu0 0.0
      %565 = vmatpush1.msra.mxu0 0.0
      %566 = vmatprep.subr.mxu0 0.0
      %567 = vmatpush1.msra.mxu0 0.0
      %568 = vmatprep.subr.mxu0 0.0
      %569 = vmatpush1.msra.mxu0 0.0
      %570 = vmatprep.subr.mxu0 0.0
      %571 = vmatpush1.msra.mxu0 0.0
      %572 = vmatprep.subr.mxu0 0.0
      %573 = vmatpush1.msra.mxu0 0.0
      %574 = vmatprep.subr.mxu0 0.0
      %575 = vmatpush1.msra.mxu0 0.0
      %576 = vmatprep.subr.mxu0 0.0
      %577 = vmatpush1.msra.mxu0 0.0
      %578 = vmatprep.subr.mxu0 0.0
      %579 = vmatpush1.msra.mxu0 0.0
      %580 = vmatprep.subr.mxu0 0.0
      %581 = vmatpush1.msra.mxu0 0.0
      %582 = vmatprep.subr.mxu0 0.0
      %583 = vmatpush1.msra.mxu0 0.0
      %584 = vmatprep.subr.mxu0 0.0
      %585 = vmatpush1.msra.mxu0 0.0
      %586 = vmatprep.subr.mxu0 0.0
      %587 = vmatpush1.msra.mxu0 0.0
      %588 = vmatprep.subr.mxu0 0.0
      %589 = vmatpush1.msra.mxu0 0.0
      %590 = vmatprep.subr.mxu0 0.0
      %591 = vmatpush1.msra.mxu0 0.0
      %592 = vmatprep.subr.mxu0 0.0
      %593 = vmatpush1.msra.mxu0 0.0
      %594 = vmatprep.subr.mxu0 0.0
      %595 = vmatpush1.msra.mxu0 0.0
      %596 = vmatprep.subr.mxu0 0.0
      %597 = vmatpush1.msra.mxu0 0.0
      %598 = vmatprep.subr.mxu0 0.0
      %599 = vmatpush1.msra.mxu0 0.0
      %600 = vmatprep.subr.mxu0 0.0
      %601 = vmatpush1.msra.mxu0 0.0
      %602 = vmatprep.mubr.f32.mxu0 0.0
      %603 = vmatmul.mubr.f32.gmra.mrb[0].mxu0 %v533
      %v604 = vpop.f32.mrb[0].mxu0
      %v605 = vadd.f32 %v530, %v604
      %v606 = vpop.f32.mrb[0].mxu0
      %607 = vdwg.mxu0
      %v608 = vmax.f32 %v605, 0.0
      %v609 = vld [vmem:[%s5] sm:$0x3]
      %v610 = vld [vmem:[%s6] sm:$0x1]
      %v612 = vlaneseq
      %v613 = vshrl.u32 %v612, 7
      %v614 = vsub.s32 0, %v613
      %v615 = vrot.slane %v610, %v614
      %v618 = vsel %vm445, %v608, 0
      %v621 = vsel %vm449, %v609, 0
      %623 = vmatprep.subr.mxu0 0.0
      %624 = vmatpush1.msra.mxu0 %v621
      %625 = vmatprep.subr.mxu0 0.0
      %626 = vmatpush1.msra.mxu0 0.0
      %627 = vmatprep.subr.mxu0 0.0
      %628 = vmatpush1.msra.mxu0 0.0
      %629 = vmatprep.subr.mxu0 0.0
      %630 = vmatpush1.msra.mxu0 0.0
      %631 = vmatprep.subr.mxu0 0.0
      %632 = vmatpush1.msra.mxu0 0.0
      %633 = vmatprep.subr.mxu0 0.0
      %634 = vmatpush1.msra.mxu0 0.0
      %635 = vmatprep.subr.mxu0 0.0
      %636 = vmatpush1.msra.mxu0 0.0
      %637 = vmatprep.subr.mxu0 0.0
      %638 = vmatpush1.msra.mxu0 0.0
      %639 = vmatprep.subr.mxu0 0.0
      %640 = vmatpush1.msra.mxu0 0.0
      %641 = vmatprep.subr.mxu0 0.0
      %642 = vmatpush1.msra.mxu0 0.0
      %643 = vmatprep.subr.mxu0 0.0
      %644 = vmatpush1.msra.mxu0 0.0
      %645 = vmatprep.subr.mxu0 0.0
      %646 = vmatpush1.msra.mxu0 0.0
      %647 = vmatprep.subr.mxu0 0.0
      %648 = vmatpush1.msra.mxu0 0.0
      %649 = vmatprep.subr.mxu0 0.0
      %650 = vmatpush1.msra.mxu0 0.0
      %651 = vmatprep.subr.mxu0 0.0
      %652 = vmatpush1.msra.mxu0 0.0
      %653 = vmatprep.subr.mxu0 0.0
      %654 = vmatpush1.msra.mxu0 0.0
      %655 = vmatprep.subr.mxu0 0.0
      %656 = vmatpush1.msra.mxu0 0.0
      %657 = vmatprep.subr.mxu0 0.0
      %658 = vmatpush1.msra.mxu0 0.0
      %659 = vmatprep.subr.mxu0 0.0
      %660 = vmatpush1.msra.mxu0 0.0
      %661 = vmatprep.subr.mxu0 0.0
      %662 = vmatpush1.msra.mxu0 0.0
      %663 = vmatprep.subr.mxu0 0.0
      %664 = vmatpush1.msra.mxu0 0.0
      %665 = vmatprep.subr.mxu0 0.0
      %666 = vmatpush1.msra.mxu0 0.0
      %667 = vmatprep.subr.mxu0 0.0
      %668 = vmatpush1.msra.mxu0 0.0
      %669 = vmatprep.subr.mxu0 0.0
      %670 = vmatpush1.msra.mxu0 0.0
      %671 = vmatprep.subr.mxu0 0.0
      %672 = vmatpush1.msra.mxu0 0.0
      %673 = vmatprep.subr.mxu0 0.0
      %674 = vmatpush1.msra.mxu0 0.0
      %675 = vmatprep.subr.mxu0 0.0
      %676 = vmatpush1.msra.mxu0 0.0
      %677 = vmatprep.subr.mxu0 0.0
      %678 = vmatpush1.msra.mxu0 0.0
      %679 = vmatprep.subr.mxu0 0.0
      %680 = vmatpush1.msra.mxu0 0.0
      %681 = vmatprep.subr.mxu0 0.0
      %682 = vmatpush1.msra.mxu0 0.0
      %683 = vmatprep.subr.mxu0 0.0
      %684 = vmatpush1.msra.mxu0 0.0
      %685 = vmatprep.subr.mxu0 0.0
      %686 = vmatpush1.msra.mxu0 0.0
      %687 = vmatprep.mubr.f32.mxu0 0.0
      %688 = vmatmul.mubr.f32.gmra.mrb[0].mxu0 %v618
      %v689 = vpop.f32.mrb[0].mxu0
      %v690 = vadd.f32 %v615, %v689
      %v691 = vpop.f32.mrb[0].mxu0
      %692 = vdwg.mxu0
      %v693 = vld [vmem:[%s7] sm:$0x3]
      %v694 = vld [vmem:[%s8] sm:$0x1]
      %v696 = vlaneseq
      %v697 = vshrl.u32 %v696, 7
      %v698 = vsub.s32 0, %v697
      %v699 = vrot.slane %v694, %v698
      %v702 = vsel %vm449, %v693, 0
      %704 = vmatprep.subr.mxu0 0.0
      %705 = vmatpush1.msra.mxu0 %v702
      %706 = vmatprep.subr.mxu0 0.0
      %707 = vmatpush1.msra.mxu0 0.0
      %708 = vmatprep.subr.mxu0 0.0
      %709 = vmatpush1.msra.mxu0 0.0
      %710 = vmatprep.subr.mxu0 0.0
      %711 = vmatpush1.msra.mxu0 0.0
      %712 = vmatprep.subr.mxu0 0.0
      %713 = vmatpush1.msra.mxu0 0.0
      %714 = vmatprep.subr.mxu0 0.0
      %715 = vmatpush1.msra.mxu0 0.0
      %716 = vmatprep.subr.mxu0 0.0
      %717 = vmatpush1.msra.mxu0 0.0
      %718 = vmatprep.subr.mxu0 0.0
      %719 = vmatpush1.msra.mxu0 0.0
      %720 = vmatprep.subr.mxu0 0.0
      %721 = vmatpush1.msra.mxu0 0.0
      %722 = vmatprep.subr.mxu0 0.0
      %723 = vmatpush1.msra.mxu0 0.0
      %724 = vmatprep.subr.mxu0 0.0
      %725 = vmatpush1.msra.mxu0 0.0
      %726 = vmatprep.subr.mxu0 0.0
      %727 = vmatpush1.msra.mxu0 0.0
      %728 = vmatprep.subr.mxu0 0.0
      %729 = vmatpush1.msra.mxu0 0.0
      %730 = vmatprep.subr.mxu0 0.0
      %731 = vmatpush1.msra.mxu0 0.0
      %732 = vmatprep.subr.mxu0 0.0
      %733 = vmatpush1.msra.mxu0 0.0
      %734 = vmatprep.subr.mxu0 0.0
      %735 = vmatpush1.msra.mxu0 0.0
      %736 = vmatprep.subr.mxu0 0.0
      %737 = vmatpush1.msra.mxu0 0.0
      %738 = vmatprep.subr.mxu0 0.0
      %739 = vmatpush1.msra.mxu0 0.0
      %740 = vmatprep.subr.mxu0 0.0
      %741 = vmatpush1.msra.mxu0 0.0
      %742 = vmatprep.subr.mxu0 0.0
      %743 = vmatpush1.msra.mxu0 0.0
      %744 = vmatprep.subr.mxu0 0.0
      %745 = vmatpush1.msra.mxu0 0.0
      %746 = vmatprep.subr.mxu0 0.0
      %747 = vmatpush1.msra.mxu0 0.0
      %748 = vmatprep.subr.mxu0 0.0
      %749 = vmatpush1.msra.mxu0 0.0
      %750 = vmatprep.subr.mxu0 0.0
      %751 = vmatpush1.msra.mxu0 0.0
      %752 = vmatprep.subr.mxu0 0.0
      %753 = vmatpush1.msra.mxu0 0.0
      %754 = vmatprep.subr.mxu0 0.0
      %755 = vmatpush1.msra.mxu0 0.0
      %756 = vmatprep.subr.mxu0 0.0
      %757 = vmatpush1.msra.mxu0 0.0
      %758 = vmatprep.subr.mxu0 0.0
      %759 = vmatpush1.msra.mxu0 0.0
      %760 = vmatprep.subr.mxu0 0.0
      %761 = vmatpush1.msra.mxu0 0.0
      %762 = vmatprep.subr.mxu0 0.0
      %763 = vmatpush1.msra.mxu0 0.0
      %764 = vmatprep.subr.mxu0 0.0
      %765 = vmatpush1.msra.mxu0 0.0
      %766 = vmatprep.subr.mxu0 0.0
      %767 = vmatpush1.msra.mxu0 0.0
      %768 = vmatprep.mubr.f32.mxu0 0.0
      %769 = vmatmul.mubr.f32.gmra.mrb[0].mxu0 %v618
      %v770 = vpop.f32.mrb[0].mxu0
      %v771 = vadd.f32 %v699, %v770
      %v772 = vpop.f32.mrb[0].mxu0
      %773 = vdwg.mxu0
      %v774 = vtanh.pop %v690
      %v775 = vmul.f32 %v774, 0.1
      %v776 = vmul.f32 %v775, 1.442695
      %v777 = vpow.pop %v776
      %779 = vrot.lane.b32.xlu0 %v777, 2
      %v780 = vpop.permute.xlu0 %779
      %v782 = vmul.f32 %v436, %v780
      %784 = vrot.lane.b32.xlu0 %v771, 2
      %v785 = vpop.permute.xlu0 %784
      %v787 = vadd.f32 %v782, %v785
      %s788 = scalar_lea.vmem %s1, 2
      %v789 = vld [vmem:[%s788] sm:$0x3]
      %s790 = scalar_lea.vmem %s2, 1
      %v791 = vld [vmem:[%s790] sm:$0x1]
      %v793 = vlaneseq
      %v794 = vshrl.u32 %v793, 7
      %v795 = vsub.s32 0, %v794
      %v796 = vrot.slane %v791, %v795
      %799 = vrot.lane.b32.xlu0 %v787, 126
      %v800 = vpop.permute.xlu0 %799
      %v801 = vsel %vm445, %v800, 0
      %v804 = vsel %vm449, %v789, 0
      %806 = vmatprep.subr.mxu0 0.0
      %807 = vmatpush1.msra.mxu0 %v804
      %808 = vmatprep.subr.mxu0 0.0
      %809 = vmatpush1.msra.mxu0 0.0
      %810 = vmatprep.subr.mxu0 0.0
      %811 = vmatpush1.msra.mxu0 0.0
      %812 = vmatprep.subr.mxu0 0.0
      %813 = vmatpush1.msra.mxu0 0.0
      %814 = vmatprep.subr.mxu0 0.0
      %815 = vmatpush1.msra.mxu0 0.0
      %816 = vmatprep.subr.mxu0 0.0
      %817 = vmatpush1.msra.mxu0 0.0
      %818 = vmatprep.subr.mxu0 0.0
      %819 = vmatpush1.msra.mxu0 0.0
      %820 = vmatprep.subr.mxu0 0.0
      %821 = vmatpush1.msra.mxu0 0.0
      %822 = vmatprep.subr.mxu0 0.0
      %823 = vmatpush1.msra.mxu0 0.0
      %824 = vmatprep.subr.mxu0 0.0
      %825 = vmatpush1.msra.mxu0 0.0
      %826 = vmatprep.subr.mxu0 0.0
      %827 = vmatpush1.msra.mxu0 0.0
      %828 = vmatprep.subr.mxu0 0.0
      %829 = vmatpush1.msra.mxu0 0.0
      %830 = vmatprep.subr.mxu0 0.0
      %831 = vmatpush1.msra.mxu0 0.0
      %832 = vmatprep.subr.mxu0 0.0
      %833 = vmatpush1.msra.mxu0 0.0
      %834 = vmatprep.subr.mxu0 0.0
      %835 = vmatpush1.msra.mxu0 0.0
      %836 = vmatprep.subr.mxu0 0.0
      %837 = vmatpush1.msra.mxu0 0.0
      %838 = vmatprep.subr.mxu0 0.0
      %839 = vmatpush1.msra.mxu0 0.0
      %840 = vmatprep.subr.mxu0 0.0
      %841 = vmatpush1.msra.mxu0 0.0
      %842 = vmatprep.subr.mxu0 0.0
      %843 = vmatpush1.msra.mxu0 0.0
      %844 = vmatprep.subr.mxu0 0.0
      %845 = vmatpush1.msra.mxu0 0.0
      %846 = vmatprep.subr.mxu0 0.0
      %847 = vmatpush1.msra.mxu0 0.0
      %848 = vmatprep.subr.mxu0 0.0
      %849 = vmatpush1.msra.mxu0 0.0
      %850 = vmatprep.subr.mxu0 0.0
      %851 = vmatpush1.msra.mxu0 0.0
      %852 = vmatprep.subr.mxu0 0.0
      %853 = vmatpush1.msra.mxu0 0.0
      %854 = vmatprep.subr.mxu0 0.0
      %855 = vmatpush1.msra.mxu0 0.0
      %856 = vmatprep.subr.mxu0 0.0
      %857 = vmatpush1.msra.mxu0 0.0
      %858 = vmatprep.subr.mxu0 0.0
      %859 = vmatpush1.msra.mxu0 0.0
      %860 = vmatprep.subr.mxu0 0.0
      %861 = vmatpush1.msra.mxu0 0.0
      %862 = vmatprep.subr.mxu0 0.0
      %863 = vmatpush1.msra.mxu0 0.0
      %864 = vmatprep.subr.mxu0 0.0
      %865 = vmatpush1.msra.mxu0 0.0
      %866 = vmatprep.subr.mxu0 0.0
      %867 = vmatpush1.msra.mxu0 0.0
      %868 = vmatprep.subr.mxu0 0.0
      %869 = vmatpush1.msra.mxu0 0.0
      %870 = vmatprep.mubr.f32.mxu0 0.0
      %871 = vmatmul.mubr.f32.gmra.mrb[0].mxu0 %v801
      %v872 = vpop.f32.mrb[0].mxu0
      %v873 = vadd.f32 %v796, %v872
      %v874 = vpop.f32.mrb[0].mxu0
      %875 = vdwg.mxu0
      %v876 = vmax.f32 %v873, 0.0
      %s877 = scalar_lea.vmem %s3, 2
      %v878 = vld [vmem:[%s877] sm:$0x3]
      %s879 = scalar_lea.vmem %s4, 1
      %v880 = vld [vmem:[%s879] sm:$0x1]
      %v882 = vlaneseq
      %v883 = vshrl.u32 %v882, 7
      %v884 = vsub.s32 0, %v883
      %v885 = vrot.slane %v880, %v884
      %v888 = vsel %vm445, %v876, 0
      %v891 = vsel %vm449, %v878, 0
      %893 = vmatprep.subr.mxu0 0.0
      %894 = vmatpush1.msra.mxu0 %v891
      %895 = vmatprep.subr.mxu0 0.0
      %896 = vmatpush1.msra.mxu0 0.0
      %897 = vmatprep.subr.mxu0 0.0
      %898 = vmatpush1.msra.mxu0 0.0
      %899 = vmatprep.subr.mxu0 0.0
      %900 = vmatpush1.msra.mxu0 0.0
      %901 = vmatprep.subr.mxu0 0.0
      %902 = vmatpush1.msra.mxu0 0.0
      %903 = vmatprep.subr.mxu0 0.0
      %904 = vmatpush1.msra.mxu0 0.0
      %905 = vmatprep.subr.mxu0 0.0
      %906 = vmatpush1.msra.mxu0 0.0
      %907 = vmatprep.subr.mxu0 0.0
      %908 = vmatpush1.msra.mxu0 0.0
      %909 = vmatprep.subr.mxu0 0.0
      %910 = vmatpush1.msra.mxu0 0.0
      %911 = vmatprep.subr.mxu0 0.0
      %912 = vmatpush1.msra.mxu0 0.0
      %913 = vmatprep.subr.mxu0 0.0
      %914 = vmatpush1.msra.mxu0 0.0
      %915 = vmatprep.subr.mxu0 0.0
      %916 = vmatpush1.msra.mxu0 0.0
      %917 = vmatprep.subr.mxu0 0.0
      %918 = vmatpush1.msra.mxu0 0.0
      %919 = vmatprep.subr.mxu0 0.0
      %920 = vmatpush1.msra.mxu0 0.0
      %921 = vmatprep.subr.mxu0 0.0
      %922 = vmatpush1.msra.mxu0 0.0
      %923 = vmatprep.subr.mxu0 0.0
      %924 = vmatpush1.msra.mxu0 0.0
      %925 = vmatprep.subr.mxu0 0.0
      %926 = vmatpush1.msra.mxu0 0.0
      %927 = vmatprep.subr.mxu0 0.0
      %928 = vmatpush1.msra.mxu0 0.0
      %929 = vmatprep.subr.mxu0 0.0
      %930 = vmatpush1.msra.mxu0 0.0
      %931 = vmatprep.subr.mxu0 0.0
      %932 = vmatpush1.msra.mxu0 0.0
      %933 = vmatprep.subr.mxu0 0.0
      %934 = vmatpush1.msra.mxu0 0.0
      %935 = vmatprep.subr.mxu0 0.0
      %936 = vmatpush1.msra.mxu0 0.0
      %937 = vmatprep.subr.mxu0 0.0
      %938 = vmatpush1.msra.mxu0 0.0
      %939 = vmatprep.subr.mxu0 0.0
      %940 = vmatpush1.msra.mxu0 0.0
      %941 = vmatprep.subr.mxu0 0.0
      %942 = vmatpush1.msra.mxu0 0.0
      %943 = vmatprep.subr.mxu0 0.0
      %944 = vmatpush1.msra.mxu0 0.0
      %945 = vmatprep.subr.mxu0 0.0
      %946 = vmatpush1.msra.mxu0 0.0
      %947 = vmatprep.subr.mxu0 0.0
      %948 = vmatpush1.msra.mxu0 0.0
      %949 = vmatprep.subr.mxu0 0.0
      %950 = vmatpush1.msra.mxu0 0.0
      %951 = vmatprep.subr.mxu0 0.0
      %952 = vmatpush1.msra.mxu0 0.0
      %953 = vmatprep.subr.mxu0 0.0
      %954 = vmatpush1.msra.mxu0 0.0
      %955 = vmatprep.subr.mxu0 0.0
      %956 = vmatpush1.msra.mxu0 0.0
      %957 = vmatprep.mubr.f32.mxu0 0.0
      %958 = vmatmul.mubr.f32.gmra.mrb[0].mxu0 %v888
      %v959 = vpop.f32.mrb[0].mxu0
      %v960 = vadd.f32 %v885, %v959
      %v961 = vpop.f32.mrb[0].mxu0
      %962 = vdwg.mxu0
      %v963 = vmax.f32 %v960, 0.0
      %s964 = scalar_lea.vmem %s5, 2
      %v965 = vld [vmem:[%s964] sm:$0x3]
      %s966 = scalar_lea.vmem %s6, 1
      %v967 = vld [vmem:[%s966] sm:$0x1]
      %v969 = vlaneseq
      %v970 = vshrl.u32 %v969, 7
      %v971 = vsub.s32 0, %v970
      %v972 = vrot.slane %v967, %v971
      %v975 = vsel %vm445, %v963, 0
      %v978 = vsel %vm449, %v965, 0
      %980 = vmatprep.subr.mxu0 0.0
      %981 = vmatpush1.msra.mxu0 %v978
      %982 = vmatprep.subr.mxu0 0.0
      %983 = vmatpush1.msra.mxu0 0.0
      %984 = vmatprep.subr.mxu0 0.0
      %985 = vmatpush1.msra.mxu0 0.0
      %986 = vmatprep.subr.mxu0 0.0
      %987 = vmatpush1.msra.mxu0 0.0
      %988 = vmatprep.subr.mxu0 0.0
      %989 = vmatpush1.msra.mxu0 0.0
      %990 = vmatprep.subr.mxu0 0.0
      %991 = vmatpush1.msra.mxu0 0.0
      %992 = vmatprep.subr.mxu0 0.0
      %993 = vmatpush1.msra.mxu0 0.0
      %994 = vmatprep.subr.mxu0 0.0
      %995 = vmatpush1.msra.mxu0 0.0
      %996 = vmatprep.subr.mxu0 0.0
      %997 = vmatpush1.msra.mxu0 0.0
      %998 = vmatprep.subr.mxu0 0.0
      %999 = vmatpush1.msra.mxu0 0.0
      %1000 = vmatprep.subr.mxu0 0.0
      %1001 = vmatpush1.msra.mxu0 0.0
      %1002 = vmatprep.subr.mxu0 0.0
      %1003 = vmatpush1.msra.mxu0 0.0
      %1004 = vmatprep.subr.mxu0 0.0
      %1005 = vmatpush1.msra.mxu0 0.0
      %1006 = vmatprep.subr.mxu0 0.0
      %1007 = vmatpush1.msra.mxu0 0.0
      %1008 = vmatprep.subr.mxu0 0.0
      %1009 = vmatpush1.msra.mxu0 0.0
      %1010 = vmatprep.subr.mxu0 0.0
      %1011 = vmatpush1.msra.mxu0 0.0
      %1012 = vmatprep.subr.mxu0 0.0
      %1013 = vmatpush1.msra.mxu0 0.0
      %1014 = vmatprep.subr.mxu0 0.0
      %1015 = vmatpush1.msra.mxu0 0.0
      %1016 = vmatprep.subr.mxu0 0.0
      %1017 = vmatpush1.msra.mxu0 0.0
      %1018 = vmatprep.subr.mxu0 0.0
      %1019 = vmatpush1.msra.mxu0 0.0
      %1020 = vmatprep.subr.mxu0 0.0
      %1021 = vmatpush1.msra.mxu0 0.0
      %1022 = vmatprep.subr.mxu0 0.0
      %1023 = vmatpush1.msra.mxu0 0.0
      %1024 = vmatprep.subr.mxu0 0.0
      %1025 = vmatpush1.msra.mxu0 0.0
      %1026 = vmatprep.subr.mxu0 0.0
      %1027 = vmatpush1.msra.mxu0 0.0
      %1028 = vmatprep.subr.mxu0 0.0
      %1029 = vmatpush1.msra.mxu0 0.0
      %1030 = vmatprep.subr.mxu0 0.0
      %1031 = vmatpush1.msra.mxu0 0.0
      %1032 = vmatprep.subr.mxu0 0.0
      %1033 = vmatpush1.msra.mxu0 0.0
      %1034 = vmatprep.subr.mxu0 0.0
      %1035 = vmatpush1.msra.mxu0 0.0
      %1036 = vmatprep.subr.mxu0 0.0
      %1037 = vmatpush1.msra.mxu0 0.0
      %1038 = vmatprep.subr.mxu0 0.0
      %1039 = vmatpush1.msra.mxu0 0.0
      %1040 = vmatprep.subr.mxu0 0.0
      %1041 = vmatpush1.msra.mxu0 0.0
      %1042 = vmatprep.subr.mxu0 0.0
      %1043 = vmatpush1.msra.mxu0 0.0
      %1044 = vmatprep.mubr.f32.mxu0 0.0
      %1045 = vmatmul.mubr.f32.gmra.mrb[0].mxu0 %v975
      %v1046 = vpop.f32.mrb[0].mxu0
      %v1047 = vadd.f32 %v972, %v1046
      %v1048 = vpop.f32.mrb[0].mxu0
      %1049 = vdwg.mxu0
      %s1050 = scalar_lea.vmem %s7, 2
      %v1051 = vld [vmem:[%s1050] sm:$0x3]
      %s1052 = scalar_lea.vmem %s8, 1
      %v1053 = vld [vmem:[%s1052] sm:$0x1]
      %v1055 = vlaneseq
      %v1056 = vshrl.u32 %v1055, 7
      %v1057 = vsub.s32 0, %v1056
      %v1058 = vrot.slane %v1053, %v1057
      %v1061 = vsel %vm449, %v1051, 0
      %1063 = vmatprep.subr.mxu0 0.0
      %1064 = vmatpush1.msra.mxu0 %v1061
      %1065 = vmatprep.subr.mxu0 0.0
      %1066 = vmatpush1.msra.mxu0 0.0
      %1067 = vmatprep.subr.mxu0 0.0
      %1068 = vmatpush1.msra.mxu0 0.0
      %1069 = vmatprep.subr.mxu0 0.0
      %1070 = vmatpush1.msra.mxu0 0.0
      %1071 = vmatprep.subr.mxu0 0.0
      %1072 = vmatpush1.msra.mxu0 0.0
      %1073 = vmatprep.subr.mxu0 0.0
      %1074 = vmatpush1.msra.mxu0 0.0
      %1075 = vmatprep.subr.mxu0 0.0
      %1076 = vmatpush1.msra.mxu0 0.0
      %1077 = vmatprep.subr.mxu0 0.0
      %1078 = vmatpush1.msra.mxu0 0.0
      %1079 = vmatprep.subr.mxu0 0.0
      %1080 = vmatpush1.msra.mxu0 0.0
      %1081 = vmatprep.subr.mxu0 0.0
      %1082 = vmatpush1.msra.mxu0 0.0
      %1083 = vmatprep.subr.mxu0 0.0
      %1084 = vmatpush1.msra.mxu0 0.0
      %1085 = vmatprep.subr.mxu0 0.0
      %1086 = vmatpush1.msra.mxu0 0.0
      %1087 = vmatprep.subr.mxu0 0.0
      %1088 = vmatpush1.msra.mxu0 0.0
      %1089 = vmatprep.subr.mxu0 0.0
      %1090 = vmatpush1.msra.mxu0 0.0
      %1091 = vmatprep.subr.mxu0 0.0
      %1092 = vmatpush1.msra.mxu0 0.0
      %1093 = vmatprep.subr.mxu0 0.0
      %1094 = vmatpush1.msra.mxu0 0.0
      %1095 = vmatprep.subr.mxu0 0.0
      %1096 = vmatpush1.msra.mxu0 0.0
      %1097 = vmatprep.subr.mxu0 0.0
      %1098 = vmatpush1.msra.mxu0 0.0
      %1099 = vmatprep.subr.mxu0 0.0
      %1100 = vmatpush1.msra.mxu0 0.0
      %1101 = vmatprep.subr.mxu0 0.0
      %1102 = vmatpush1.msra.mxu0 0.0
      %1103 = vmatprep.subr.mxu0 0.0
      %1104 = vmatpush1.msra.mxu0 0.0
      %1105 = vmatprep.subr.mxu0 0.0
      %1106 = vmatpush1.msra.mxu0 0.0
      %1107 = vmatprep.subr.mxu0 0.0
      %1108 = vmatpush1.msra.mxu0 0.0
      %1109 = vmatprep.subr.mxu0 0.0
      %1110 = vmatpush1.msra.mxu0 0.0
      %1111 = vmatprep.subr.mxu0 0.0
      %1112 = vmatpush1.msra.mxu0 0.0
      %1113 = vmatprep.subr.mxu0 0.0
      %1114 = vmatpush1.msra.mxu0 0.0
      %1115 = vmatprep.subr.mxu0 0.0
      %1116 = vmatpush1.msra.mxu0 0.0
      %1117 = vmatprep.subr.mxu0 0.0
      %1118 = vmatpush1.msra.mxu0 0.0
      %1119 = vmatprep.subr.mxu0 0.0
      %1120 = vmatpush1.msra.mxu0 0.0
      %1121 = vmatprep.subr.mxu0 0.0
      %1122 = vmatpush1.msra.mxu0 0.0
      %1123 = vmatprep.subr.mxu0 0.0
      %1124 = vmatpush1.msra.mxu0 0.0
      %1125 = vmatprep.subr.mxu0 0.0
      %1126 = vmatpush1.msra.mxu0 0.0
      %1127 = vmatprep.mubr.f32.mxu0 0.0
      %1128 = vmatmul.mubr.f32.gmra.mrb[0].mxu0 %v975
      %v1129 = vpop.f32.mrb[0].mxu0
      %v1130 = vadd.f32 %v1058, %v1129
      %v1131 = vpop.f32.mrb[0].mxu0
      %1132 = vdwg.mxu0
      %v1133 = vtanh.pop %v1047
      %v1134 = vmul.f32 %v1133, 0.1
      %v1135 = vmul.f32 %v1134, 1.442695
      %v1136 = vpow.pop %v1135
      %v1137 = vmul.f32 %v436, %v1136
      %v1138 = vadd.f32 %v1137, %v1130
      %v1139 = vld [vmem:[%s9] sm:$0x3]
      %v1140 = vld [vmem:[%s10] sm:$0x3]
      %v1141 = vld [vmem:[%s11] sm:$0x3]
      %v1142 = vld [vmem:[%s12] sm:$0x3]
      %v1144 = vsel %vm449, %v1141, 0
      %1146 = vmatprep.subr.mxu0 0.0
      %1147 = vmatpush1.msra.mxu0 %v1144
      %1148 = vmatprep.subr.mxu0 0.0
      %1149 = vmatpush1.msra.mxu0 0.0
      %1150 = vmatprep.subr.mxu0 0.0
      %1151 = vmatpush1.msra.mxu0 0.0
      %1152 = vmatprep.subr.mxu0 0.0
      %1153 = vmatpush1.msra.mxu0 0.0
      %1154 = vmatprep.subr.mxu0 0.0
      %1155 = vmatpush1.msra.mxu0 0.0
      %1156 = vmatprep.subr.mxu0 0.0
      %1157 = vmatpush1.msra.mxu0 0.0
      %1158 = vmatprep.subr.mxu0 0.0
      %1159 = vmatpush1.msra.mxu0 0.0
      %1160 = vmatprep.subr.mxu0 0.0
      %1161 = vmatpush1.msra.mxu0 0.0
      %1162 = vmatprep.subr.mxu0 0.0
      %1163 = vmatpush1.msra.mxu0 0.0
      %1164 = vmatprep.subr.mxu0 0.0
      %1165 = vmatpush1.msra.mxu0 0.0
      %1166 = vmatprep.subr.mxu0 0.0
      %1167 = vmatpush1.msra.mxu0 0.0
      %1168 = vmatprep.subr.mxu0 0.0
      %1169 = vmatpush1.msra.mxu0 0.0
      %1170 = vmatprep.subr.mxu0 0.0
      %1171 = vmatpush1.msra.mxu0 0.0
      %1172 = vmatprep.subr.mxu0 0.0
      %1173 = vmatpush1.msra.mxu0 0.0
      %1174 = vmatprep.subr.mxu0 0.0
      %1175 = vmatpush1.msra.mxu0 0.0
      %1176 = vmatprep.subr.mxu0 0.0
      %1177 = vmatpush1.msra.mxu0 0.0
      %1178 = vmatprep.subr.mxu0 0.0
      %1179 = vmatpush1.msra.mxu0 0.0
      %1180 = vmatprep.subr.mxu0 0.0
      %1181 = vmatpush1.msra.mxu0 0.0
      %1182 = vmatprep.subr.mxu0 0.0
      %1183 = vmatpush1.msra.mxu0 0.0
      %1184 = vmatprep.subr.mxu0 0.0
      %1185 = vmatpush1.msra.mxu0 0.0
      %1186 = vmatprep.subr.mxu0 0.0
      %1187 = vmatpush1.msra.mxu0 0.0
      %1188 = vmatprep.subr.mxu0 0.0
      %1189 = vmatpush1.msra.mxu0 0.0
      %1190 = vmatprep.subr.mxu0 0.0
      %1191 = vmatpush1.msra.mxu0 0.0
      %1192 = vmatprep.subr.mxu0 0.0
      %1193 = vmatpush1.msra.mxu0 0.0
      %1194 = vmatprep.subr.mxu0 0.0
      %1195 = vmatpush1.msra.mxu0 0.0
      %1196 = vmatprep.subr.mxu0 0.0
      %1197 = vmatpush1.msra.mxu0 0.0
      %1198 = vmatprep.subr.mxu0 0.0
      %1199 = vmatpush1.msra.mxu0 0.0
      %1200 = vmatprep.subr.mxu0 0.0
      %1201 = vmatpush1.msra.mxu0 0.0
      %1202 = vmatprep.subr.mxu0 0.0
      %1203 = vmatpush1.msra.mxu0 0.0
      %1204 = vmatprep.subr.mxu0 0.0
      %1205 = vmatpush1.msra.mxu0 0.0
      %1206 = vmatprep.subr.mxu0 0.0
      %1207 = vmatpush1.msra.mxu0 0.0
      %1208 = vmatprep.subr.mxu0 0.0
      %1209 = vmatpush1.msra.mxu0 0.0
      %1210 = vmatprep.mubr.f32.mxu0 0.0
      %1211 = vmatmul.mubr.f32.gmra.mrb[0].mxu0 %v801
      %v1212 = vpop.f32.mrb[0].mxu0
      %v1213 = vadd.f32 0.0, %v1212
      %v1214 = vpop.f32.mrb[0].mxu0
      %1215 = vdwg.mxu0
      %v1217 = vsel %vm445, %v1138, 0
      %v1220 = vsel %vm449, %v1139, 0
      %1222 = vmatprep.subr.mxu0 0.0
      %1223 = vmatpush1.msra.mxu0 %v1220
      %1224 = vmatprep.subr.mxu0 0.0
      %1225 = vmatpush1.msra.mxu0 0.0
      %1226 = vmatprep.subr.mxu0 0.0
      %1227 = vmatpush1.msra.mxu0 0.0
      %1228 = vmatprep.subr.mxu0 0.0
      %1229 = vmatpush1.msra.mxu0 0.0
      %1230 = vmatprep.subr.mxu0 0.0
      %1231 = vmatpush1.msra.mxu0 0.0
      %1232 = vmatprep.subr.mxu0 0.0
      %1233 = vmatpush1.msra.mxu0 0.0
      %1234 = vmatprep.subr.mxu0 0.0
      %1235 = vmatpush1.msra.mxu0 0.0
      %1236 = vmatprep.subr.mxu0 0.0
      %1237 = vmatpush1.msra.mxu0 0.0
      %1238 = vmatprep.subr.mxu0 0.0
      %1239 = vmatpush1.msra.mxu0 0.0
      %1240 = vmatprep.subr.mxu0 0.0
      %1241 = vmatpush1.msra.mxu0 0.0
      %1242 = vmatprep.subr.mxu0 0.0
      %1243 = vmatpush1.msra.mxu0 0.0
      %1244 = vmatprep.subr.mxu0 0.0
      %1245 = vmatpush1.msra.mxu0 0.0
      %1246 = vmatprep.subr.mxu0 0.0
      %1247 = vmatpush1.msra.mxu0 0.0
      %1248 = vmatprep.subr.mxu0 0.0
      %1249 = vmatpush1.msra.mxu0 0.0
      %1250 = vmatprep.subr.mxu0 0.0
      %1251 = vmatpush1.msra.mxu0 0.0
      %1252 = vmatprep.subr.mxu0 0.0
      %1253 = vmatpush1.msra.mxu0 0.0
      %1254 = vmatprep.subr.mxu0 0.0
      %1255 = vmatpush1.msra.mxu0 0.0
      %1256 = vmatprep.subr.mxu0 0.0
      %1257 = vmatpush1.msra.mxu0 0.0
      %1258 = vmatprep.subr.mxu0 0.0
      %1259 = vmatpush1.msra.mxu0 0.0
      %1260 = vmatprep.subr.mxu0 0.0
      %1261 = vmatpush1.msra.mxu0 0.0
      %1262 = vmatprep.subr.mxu0 0.0
      %1263 = vmatpush1.msra.mxu0 0.0
      %1264 = vmatprep.subr.mxu0 0.0
      %1265 = vmatpush1.msra.mxu0 0.0
      %1266 = vmatprep.subr.mxu0 0.0
      %1267 = vmatpush1.msra.mxu0 0.0
      %1268 = vmatprep.subr.mxu0 0.0
      %1269 = vmatpush1.msra.mxu0 0.0
      %1270 = vmatprep.subr.mxu0 0.0
      %1271 = vmatpush1.msra.mxu0 0.0
      %1272 = vmatprep.subr.mxu0 0.0
      %1273 = vmatpush1.msra.mxu0 0.0
      %1274 = vmatprep.subr.mxu0 0.0
      %1275 = vmatpush1.msra.mxu0 0.0
      %1276 = vmatprep.subr.mxu0 0.0
      %1277 = vmatpush1.msra.mxu0 0.0
      %1278 = vmatprep.subr.mxu0 0.0
      %1279 = vmatpush1.msra.mxu0 0.0
      %1280 = vmatprep.subr.mxu0 0.0
      %1281 = vmatpush1.msra.mxu0 0.0
      %1282 = vmatprep.subr.mxu0 0.0
      %1283 = vmatpush1.msra.mxu0 0.0
      %1284 = vmatprep.subr.mxu0 0.0
      %1285 = vmatpush1.msra.mxu0 0.0
      %1286 = vmatprep.mubr.f32.mxu0 0.0
      %1287 = vmatmul.mubr.f32.gmra.mrb[0].mxu0 %v1217
      %v1288 = vpop.f32.mrb[0].mxu0
      %v1289 = vadd.f32 %v1213, %v1288
      %v1290 = vpop.f32.mrb[0].mxu0
      %1291 = vdwg.mxu0
      %v1293 = vsel %vm449, %v1142, 0
      %1295 = vmatprep.subr.mxu0 0.0
      %1296 = vmatpush1.msra.mxu0 %v1293
      %1297 = vmatprep.subr.mxu0 0.0
      %1298 = vmatpush1.msra.mxu0 0.0
      %1299 = vmatprep.subr.mxu0 0.0
      %1300 = vmatpush1.msra.mxu0 0.0
      %1301 = vmatprep.subr.mxu0 0.0
      %1302 = vmatpush1.msra.mxu0 0.0
      %1303 = vmatprep.subr.mxu0 0.0
      %1304 = vmatpush1.msra.mxu0 0.0
      %1305 = vmatprep.subr.mxu0 0.0
      %1306 = vmatpush1.msra.mxu0 0.0
      %1307 = vmatprep.subr.mxu0 0.0
      %1308 = vmatpush1.msra.mxu0 0.0
      %1309 = vmatprep.subr.mxu0 0.0
      %1310 = vmatpush1.msra.mxu0 0.0
      %1311 = vmatprep.subr.mxu0 0.0
      %1312 = vmatpush1.msra.mxu0 0.0
      %1313 = vmatprep.subr.mxu0 0.0
      %1314 = vmatpush1.msra.mxu0 0.0
      %1315 = vmatprep.subr.mxu0 0.0
      %1316 = vmatpush1.msra.mxu0 0.0
      %1317 = vmatprep.subr.mxu0 0.0
      %1318 = vmatpush1.msra.mxu0 0.0
      %1319 = vmatprep.subr.mxu0 0.0
      %1320 = vmatpush1.msra.mxu0 0.0
      %1321 = vmatprep.subr.mxu0 0.0
      %1322 = vmatpush1.msra.mxu0 0.0
      %1323 = vmatprep.subr.mxu0 0.0
      %1324 = vmatpush1.msra.mxu0 0.0
      %1325 = vmatprep.subr.mxu0 0.0
      %1326 = vmatpush1.msra.mxu0 0.0
      %1327 = vmatprep.subr.mxu0 0.0
      %1328 = vmatpush1.msra.mxu0 0.0
      %1329 = vmatprep.subr.mxu0 0.0
      %1330 = vmatpush1.msra.mxu0 0.0
      %1331 = vmatprep.subr.mxu0 0.0
      %1332 = vmatpush1.msra.mxu0 0.0
      %1333 = vmatprep.subr.mxu0 0.0
      %1334 = vmatpush1.msra.mxu0 0.0
      %1335 = vmatprep.subr.mxu0 0.0
      %1336 = vmatpush1.msra.mxu0 0.0
      %1337 = vmatprep.subr.mxu0 0.0
      %1338 = vmatpush1.msra.mxu0 0.0
      %1339 = vmatprep.subr.mxu0 0.0
      %1340 = vmatpush1.msra.mxu0 0.0
      %1341 = vmatprep.subr.mxu0 0.0
      %1342 = vmatpush1.msra.mxu0 0.0
      %1343 = vmatprep.subr.mxu0 0.0
      %1344 = vmatpush1.msra.mxu0 0.0
      %1345 = vmatprep.subr.mxu0 0.0
      %1346 = vmatpush1.msra.mxu0 0.0
      %1347 = vmatprep.subr.mxu0 0.0
      %1348 = vmatpush1.msra.mxu0 0.0
      %1349 = vmatprep.subr.mxu0 0.0
      %1350 = vmatpush1.msra.mxu0 0.0
      %1351 = vmatprep.subr.mxu0 0.0
      %1352 = vmatpush1.msra.mxu0 0.0
      %1353 = vmatprep.subr.mxu0 0.0
      %1354 = vmatpush1.msra.mxu0 0.0
      %1355 = vmatprep.subr.mxu0 0.0
      %1356 = vmatpush1.msra.mxu0 0.0
      %1357 = vmatprep.subr.mxu0 0.0
      %1358 = vmatpush1.msra.mxu0 0.0
      %1359 = vmatprep.mubr.f32.mxu0 0.0
      %1360 = vmatmul.mubr.f32.gmra.mrb[0].mxu0 %v801
      %v1361 = vpop.f32.mrb[0].mxu0
      %v1362 = vadd.f32 0.0, %v1361
      %v1363 = vpop.f32.mrb[0].mxu0
      %1364 = vdwg.mxu0
      %v1366 = vsel %vm449, %v1140, 0
      %1368 = vmatprep.subr.mxu0 0.0
      %1369 = vmatpush1.msra.mxu0 %v1366
      %1370 = vmatprep.subr.mxu0 0.0
      %1371 = vmatpush1.msra.mxu0 0.0
      %1372 = vmatprep.subr.mxu0 0.0
      %1373 = vmatpush1.msra.mxu0 0.0
      %1374 = vmatprep.subr.mxu0 0.0
      %1375 = vmatpush1.msra.mxu0 0.0
      %1376 = vmatprep.subr.mxu0 0.0
      %1377 = vmatpush1.msra.mxu0 0.0
      %1378 = vmatprep.subr.mxu0 0.0
      %1379 = vmatpush1.msra.mxu0 0.0
      %1380 = vmatprep.subr.mxu0 0.0
      %1381 = vmatpush1.msra.mxu0 0.0
      %1382 = vmatprep.subr.mxu0 0.0
      %1383 = vmatpush1.msra.mxu0 0.0
      %1384 = vmatprep.subr.mxu0 0.0
      %1385 = vmatpush1.msra.mxu0 0.0
      %1386 = vmatprep.subr.mxu0 0.0
      %1387 = vmatpush1.msra.mxu0 0.0
      %1388 = vmatprep.subr.mxu0 0.0
      %1389 = vmatpush1.msra.mxu0 0.0
      %1390 = vmatprep.subr.mxu0 0.0
      %1391 = vmatpush1.msra.mxu0 0.0
      %1392 = vmatprep.subr.mxu0 0.0
      %1393 = vmatpush1.msra.mxu0 0.0
      %1394 = vmatprep.subr.mxu0 0.0
      %1395 = vmatpush1.msra.mxu0 0.0
      %1396 = vmatprep.subr.mxu0 0.0
      %1397 = vmatpush1.msra.mxu0 0.0
      %1398 = vmatprep.subr.mxu0 0.0
      %1399 = vmatpush1.msra.mxu0 0.0
      %1400 = vmatprep.subr.mxu0 0.0
      %1401 = vmatpush1.msra.mxu0 0.0
      %1402 = vmatprep.subr.mxu0 0.0
      %1403 = vmatpush1.msra.mxu0 0.0
      %1404 = vmatprep.subr.mxu0 0.0
      %1405 = vmatpush1.msra.mxu0 0.0
      %1406 = vmatprep.subr.mxu0 0.0
      %1407 = vmatpush1.msra.mxu0 0.0
      %1408 = vmatprep.subr.mxu0 0.0
      %1409 = vmatpush1.msra.mxu0 0.0
      %1410 = vmatprep.subr.mxu0 0.0
      %1411 = vmatpush1.msra.mxu0 0.0
      %1412 = vmatprep.subr.mxu0 0.0
      %1413 = vmatpush1.msra.mxu0 0.0
      %1414 = vmatprep.subr.mxu0 0.0
      %1415 = vmatpush1.msra.mxu0 0.0
      %1416 = vmatprep.subr.mxu0 0.0
      %1417 = vmatpush1.msra.mxu0 0.0
      %1418 = vmatprep.subr.mxu0 0.0
      %1419 = vmatpush1.msra.mxu0 0.0
      %1420 = vmatprep.subr.mxu0 0.0
      %1421 = vmatpush1.msra.mxu0 0.0
      %1422 = vmatprep.subr.mxu0 0.0
      %1423 = vmatpush1.msra.mxu0 0.0
      %1424 = vmatprep.subr.mxu0 0.0
      %1425 = vmatpush1.msra.mxu0 0.0
      %1426 = vmatprep.subr.mxu0 0.0
      %1427 = vmatpush1.msra.mxu0 0.0
      %1428 = vmatprep.subr.mxu0 0.0
      %1429 = vmatpush1.msra.mxu0 0.0
      %1430 = vmatprep.subr.mxu0 0.0
      %1431 = vmatpush1.msra.mxu0 0.0
      %1432 = vmatprep.mubr.f32.mxu0 0.0
      %1433 = vmatmul.mubr.f32.gmra.mrb[0].mxu0 %v1217
      %v1434 = vpop.f32.mrb[0].mxu0
      %v1435 = vadd.f32 %v1362, %v1434
      %v1436 = vpop.f32.mrb[0].mxu0
      %1437 = vdwg.mxu0
      %s1438 = scalar_lea.vmem %s1, 4
      %v1439 = vld [vmem:[%s1438] sm:$0x3]
      %s1440 = scalar_lea.vmem %s2, 2
      %v1441 = vld [vmem:[%s1440] sm:$0x1]
      %v1443 = vlaneseq
      %v1444 = vshrl.u32 %v1443, 7
      %v1445 = vsub.s32 0, %v1444
      %v1446 = vrot.slane %v1441, %v1445
      %v1449 = vsel %vm445, %v1289, 0
      %v1452 = vsel %vm449, %v1439, 0
      %1454 = vmatprep.subr.mxu0 0.0
      %1455 = vmatpush1.msra.mxu0 %v1452
      %1456 = vmatprep.subr.mxu0 0.0
      %1457 = vmatpush1.msra.mxu0 0.0
      %1458 = vmatprep.subr.mxu0 0.0
      %1459 = vmatpush1.msra.mxu0 0.0
      %1460 = vmatprep.subr.mxu0 0.0
      %1461 = vmatpush1.msra.mxu0 0.0
      %1462 = vmatprep.subr.mxu0 0.0
      %1463 = vmatpush1.msra.mxu0 0.0
      %1464 = vmatprep.subr.mxu0 0.0
      %1465 = vmatpush1.msra.mxu0 0.0
      %1466 = vmatprep.subr.mxu0 0.0
      %1467 = vmatpush1.msra.mxu0 0.0
      %1468 = vmatprep.subr.mxu0 0.0
      %1469 = vmatpush1.msra.mxu0 0.0
      %1470 = vmatprep.subr.mxu0 0.0
      %1471 = vmatpush1.msra.mxu0 0.0
      %1472 = vmatprep.subr.mxu0 0.0
      %1473 = vmatpush1.msra.mxu0 0.0
      %1474 = vmatprep.subr.mxu0 0.0
      %1475 = vmatpush1.msra.mxu0 0.0
      %1476 = vmatprep.subr.mxu0 0.0
      %1477 = vmatpush1.msra.mxu0 0.0
      %1478 = vmatprep.subr.mxu0 0.0
      %1479 = vmatpush1.msra.mxu0 0.0
      %1480 = vmatprep.subr.mxu0 0.0
      %1481 = vmatpush1.msra.mxu0 0.0
      %1482 = vmatprep.subr.mxu0 0.0
      %1483 = vmatpush1.msra.mxu0 0.0
      %1484 = vmatprep.subr.mxu0 0.0
      %1485 = vmatpush1.msra.mxu0 0.0
      %1486 = vmatprep.subr.mxu0 0.0
      %1487 = vmatpush1.msra.mxu0 0.0
      %1488 = vmatprep.subr.mxu0 0.0
      %1489 = vmatpush1.msra.mxu0 0.0
      %1490 = vmatprep.subr.mxu0 0.0
      %1491 = vmatpush1.msra.mxu0 0.0
      %1492 = vmatprep.subr.mxu0 0.0
      %1493 = vmatpush1.msra.mxu0 0.0
      %1494 = vmatprep.subr.mxu0 0.0
      %1495 = vmatpush1.msra.mxu0 0.0
      %1496 = vmatprep.subr.mxu0 0.0
      %1497 = vmatpush1.msra.mxu0 0.0
      %1498 = vmatprep.subr.mxu0 0.0
      %1499 = vmatpush1.msra.mxu0 0.0
      %1500 = vmatprep.subr.mxu0 0.0
      %1501 = vmatpush1.msra.mxu0 0.0
      %1502 = vmatprep.subr.mxu0 0.0
      %1503 = vmatpush1.msra.mxu0 0.0
      %1504 = vmatprep.subr.mxu0 0.0
      %1505 = vmatpush1.msra.mxu0 0.0
      %1506 = vmatprep.subr.mxu0 0.0
      %1507 = vmatpush1.msra.mxu0 0.0
      %1508 = vmatprep.subr.mxu0 0.0
      %1509 = vmatpush1.msra.mxu0 0.0
      %1510 = vmatprep.subr.mxu0 0.0
      %1511 = vmatpush1.msra.mxu0 0.0
      %1512 = vmatprep.subr.mxu0 0.0
      %1513 = vmatpush1.msra.mxu0 0.0
      %1514 = vmatprep.subr.mxu0 0.0
      %1515 = vmatpush1.msra.mxu0 0.0
      %1516 = vmatprep.subr.mxu0 0.0
      %1517 = vmatpush1.msra.mxu0 0.0
      %1518 = vmatprep.mubr.f32.mxu0 0.0
      %1519 = vmatmul.mubr.f32.gmra.mrb[0].mxu0 %v1449
      %v1520 = vpop.f32.mrb[0].mxu0
      %v1521 = vadd.f32 %v1446, %v1520
      %v1522 = vpop.f32.mrb[0].mxu0
      %1523 = vdwg.mxu0
      %v1524 = vmax.f32 %v1521, 0.0
      %s1525 = scalar_lea.vmem %s3, 4
      %v1526 = vld [vmem:[%s1525] sm:$0x3]
      %s1527 = scalar_lea.vmem %s4, 2
      %v1528 = vld [vmem:[%s1527] sm:$0x1]
      %v1530 = vlaneseq
      %v1531 = vshrl.u32 %v1530, 7
      %v1532 = vsub.s32 0, %v1531
      %v1533 = vrot.slane %v1528, %v1532
      %v1536 = vsel %vm445, %v1524, 0
      %v1539 = vsel %vm449, %v1526, 0
      %1541 = vmatprep.subr.mxu0 0.0
      %1542 = vmatpush1.msra.mxu0 %v1539
      %1543 = vmatprep.subr.mxu0 0.0
      %1544 = vmatpush1.msra.mxu0 0.0
      %1545 = vmatprep.subr.mxu0 0.0
      %1546 = vmatpush1.msra.mxu0 0.0
      %1547 = vmatprep.subr.mxu0 0.0
      %1548 = vmatpush1.msra.mxu0 0.0
      %1549 = vmatprep.subr.mxu0 0.0
      %1550 = vmatpush1.msra.mxu0 0.0
      %1551 = vmatprep.subr.mxu0 0.0
      %1552 = vmatpush1.msra.mxu0 0.0
      %1553 = vmatprep.subr.mxu0 0.0
      %1554 = vmatpush1.msra.mxu0 0.0
      %1555 = vmatprep.subr.mxu0 0.0
      %1556 = vmatpush1.msra.mxu0 0.0
      %1557 = vmatprep.subr.mxu0 0.0
      %1558 = vmatpush1.msra.mxu0 0.0
      %1559 = vmatprep.subr.mxu0 0.0
      %1560 = vmatpush1.msra.mxu0 0.0
      %1561 = vmatprep.subr.mxu0 0.0
      %1562 = vmatpush1.msra.mxu0 0.0
      %1563 = vmatprep.subr.mxu0 0.0
      %1564 = vmatpush1.msra.mxu0 0.0
      %1565 = vmatprep.subr.mxu0 0.0
      %1566 = vmatpush1.msra.mxu0 0.0
      %1567 = vmatprep.subr.mxu0 0.0
      %1568 = vmatpush1.msra.mxu0 0.0
      %1569 = vmatprep.subr.mxu0 0.0
      %1570 = vmatpush1.msra.mxu0 0.0
      %1571 = vmatprep.subr.mxu0 0.0
      %1572 = vmatpush1.msra.mxu0 0.0
      %1573 = vmatprep.subr.mxu0 0.0
      %1574 = vmatpush1.msra.mxu0 0.0
      %1575 = vmatprep.subr.mxu0 0.0
      %1576 = vmatpush1.msra.mxu0 0.0
      %1577 = vmatprep.subr.mxu0 0.0
      %1578 = vmatpush1.msra.mxu0 0.0
      %1579 = vmatprep.subr.mxu0 0.0
      %1580 = vmatpush1.msra.mxu0 0.0
      %1581 = vmatprep.subr.mxu0 0.0
      %1582 = vmatpush1.msra.mxu0 0.0
      %1583 = vmatprep.subr.mxu0 0.0
      %1584 = vmatpush1.msra.mxu0 0.0
      %1585 = vmatprep.subr.mxu0 0.0
      %1586 = vmatpush1.msra.mxu0 0.0
      %1587 = vmatprep.subr.mxu0 0.0
      %1588 = vmatpush1.msra.mxu0 0.0
      %1589 = vmatprep.subr.mxu0 0.0
      %1590 = vmatpush1.msra.mxu0 0.0
      %1591 = vmatprep.subr.mxu0 0.0
      %1592 = vmatpush1.msra.mxu0 0.0
      %1593 = vmatprep.subr.mxu0 0.0
      %1594 = vmatpush1.msra.mxu0 0.0
      %1595 = vmatprep.subr.mxu0 0.0
      %1596 = vmatpush1.msra.mxu0 0.0
      %1597 = vmatprep.subr.mxu0 0.0
      %1598 = vmatpush1.msra.mxu0 0.0
      %1599 = vmatprep.subr.mxu0 0.0
      %1600 = vmatpush1.msra.mxu0 0.0
      %1601 = vmatprep.subr.mxu0 0.0
      %1602 = vmatpush1.msra.mxu0 0.0
      %1603 = vmatprep.subr.mxu0 0.0
      %1604 = vmatpush1.msra.mxu0 0.0
      %1605 = vmatprep.mubr.f32.mxu0 0.0
      %1606 = vmatmul.mubr.f32.gmra.mrb[0].mxu0 %v1536
      %v1607 = vpop.f32.mrb[0].mxu0
      %v1608 = vadd.f32 %v1533, %v1607
      %v1609 = vpop.f32.mrb[0].mxu0
      %1610 = vdwg.mxu0
      %v1611 = vmax.f32 %v1608, 0.0
      %s1612 = scalar_lea.vmem %s5, 4
      %v1613 = vld [vmem:[%s1612] sm:$0x3]
      %s1614 = scalar_lea.vmem %s6, 2
      %v1615 = vld [vmem:[%s1614] sm:$0x1]
      %v1617 = vlaneseq
      %v1618 = vshrl.u32 %v1617, 7
      %v1619 = vsub.s32 0, %v1618
      %v1620 = vrot.slane %v1615, %v1619
      %v1623 = vsel %vm445, %v1611, 0
      %v1626 = vsel %vm449, %v1613, 0
      %1628 = vmatprep.subr.mxu0 0.0
      %1629 = vmatpush1.msra.mxu0 %v1626
      %1630 = vmatprep.subr.mxu0 0.0
      %1631 = vmatpush1.msra.mxu0 0.0
      %1632 = vmatprep.subr.mxu0 0.0
      %1633 = vmatpush1.msra.mxu0 0.0
      %1634 = vmatprep.subr.mxu0 0.0
      %1635 = vmatpush1.msra.mxu0 0.0
      %1636 = vmatprep.subr.mxu0 0.0
      %1637 = vmatpush1.msra.mxu0 0.0
      %1638 = vmatprep.subr.mxu0 0.0
      %1639 = vmatpush1.msra.mxu0 0.0
      %1640 = vmatprep.subr.mxu0 0.0
      %1641 = vmatpush1.msra.mxu0 0.0
      %1642 = vmatprep.subr.mxu0 0.0
      %1643 = vmatpush1.msra.mxu0 0.0
      %1644 = vmatprep.subr.mxu0 0.0
      %1645 = vmatpush1.msra.mxu0 0.0
      %1646 = vmatprep.subr.mxu0 0.0
      %1647 = vmatpush1.msra.mxu0 0.0
      %1648 = vmatprep.subr.mxu0 0.0
      %1649 = vmatpush1.msra.mxu0 0.0
      %1650 = vmatprep.subr.mxu0 0.0
      %1651 = vmatpush1.msra.mxu0 0.0
      %1652 = vmatprep.subr.mxu0 0.0
      %1653 = vmatpush1.msra.mxu0 0.0
      %1654 = vmatprep.subr.mxu0 0.0
      %1655 = vmatpush1.msra.mxu0 0.0
      %1656 = vmatprep.subr.mxu0 0.0
      %1657 = vmatpush1.msra.mxu0 0.0
      %1658 = vmatprep.subr.mxu0 0.0
      %1659 = vmatpush1.msra.mxu0 0.0
      %1660 = vmatprep.subr.mxu0 0.0
      %1661 = vmatpush1.msra.mxu0 0.0
      %1662 = vmatprep.subr.mxu0 0.0
      %1663 = vmatpush1.msra.mxu0 0.0
      %1664 = vmatprep.subr.mxu0 0.0
      %1665 = vmatpush1.msra.mxu0 0.0
      %1666 = vmatprep.subr.mxu0 0.0
      %1667 = vmatpush1.msra.mxu0 0.0
      %1668 = vmatprep.subr.mxu0 0.0
      %1669 = vmatpush1.msra.mxu0 0.0
      %1670 = vmatprep.subr.mxu0 0.0
      %1671 = vmatpush1.msra.mxu0 0.0
      %1672 = vmatprep.subr.mxu0 0.0
      %1673 = vmatpush1.msra.mxu0 0.0
      %1674 = vmatprep.subr.mxu0 0.0
      %1675 = vmatpush1.msra.mxu0 0.0
      %1676 = vmatprep.subr.mxu0 0.0
      %1677 = vmatpush1.msra.mxu0 0.0
      %1678 = vmatprep.subr.mxu0 0.0
      %1679 = vmatpush1.msra.mxu0 0.0
      %1680 = vmatprep.subr.mxu0 0.0
      %1681 = vmatpush1.msra.mxu0 0.0
      %1682 = vmatprep.subr.mxu0 0.0
      %1683 = vmatpush1.msra.mxu0 0.0
      %1684 = vmatprep.subr.mxu0 0.0
      %1685 = vmatpush1.msra.mxu0 0.0
      %1686 = vmatprep.subr.mxu0 0.0
      %1687 = vmatpush1.msra.mxu0 0.0
      %1688 = vmatprep.subr.mxu0 0.0
      %1689 = vmatpush1.msra.mxu0 0.0
      %1690 = vmatprep.subr.mxu0 0.0
      %1691 = vmatpush1.msra.mxu0 0.0
      %1692 = vmatprep.mubr.f32.mxu0 0.0
      %1693 = vmatmul.mubr.f32.gmra.mrb[0].mxu0 %v1623
      %v1694 = vpop.f32.mrb[0].mxu0
      %v1695 = vadd.f32 %v1620, %v1694
      %v1696 = vpop.f32.mrb[0].mxu0
      %1697 = vdwg.mxu0
      %s1698 = scalar_lea.vmem %s7, 4
      %v1699 = vld [vmem:[%s1698] sm:$0x3]
      %s1700 = scalar_lea.vmem %s8, 2
      %v1701 = vld [vmem:[%s1700] sm:$0x1]
      %v1703 = vlaneseq
      %v1704 = vshrl.u32 %v1703, 7
      %v1705 = vsub.s32 0, %v1704
      %v1706 = vrot.slane %v1701, %v1705
      %v1709 = vsel %vm449, %v1699, 0
      %1711 = vmatprep.subr.mxu0 0.0
      %1712 = vmatpush1.msra.mxu0 %v1709
      %1713 = vmatprep.subr.mxu0 0.0
      %1714 = vmatpush1.msra.mxu0 0.0
      %1715 = vmatprep.subr.mxu0 0.0
      %1716 = vmatpush1.msra.mxu0 0.0
      %1717 = vmatprep.subr.mxu0 0.0
      %1718 = vmatpush1.msra.mxu0 0.0
      %1719 = vmatprep.subr.mxu0 0.0
      %1720 = vmatpush1.msra.mxu0 0.0
      %1721 = vmatprep.subr.mxu0 0.0
      %1722 = vmatpush1.msra.mxu0 0.0
      %1723 = vmatprep.subr.mxu0 0.0
      %1724 = vmatpush1.msra.mxu0 0.0
      %1725 = vmatprep.subr.mxu0 0.0
      %1726 = vmatpush1.msra.mxu0 0.0
      %1727 = vmatprep.subr.mxu0 0.0
      %1728 = vmatpush1.msra.mxu0 0.0
      %1729 = vmatprep.subr.mxu0 0.0
      %1730 = vmatpush1.msra.mxu0 0.0
      %1731 = vmatprep.subr.mxu0 0.0
      %1732 = vmatpush1.msra.mxu0 0.0
      %1733 = vmatprep.subr.mxu0 0.0
      %1734 = vmatpush1.msra.mxu0 0.0
      %1735 = vmatprep.subr.mxu0 0.0
      %1736 = vmatpush1.msra.mxu0 0.0
      %1737 = vmatprep.subr.mxu0 0.0
      %1738 = vmatpush1.msra.mxu0 0.0
      %1739 = vmatprep.subr.mxu0 0.0
      %1740 = vmatpush1.msra.mxu0 0.0
      %1741 = vmatprep.subr.mxu0 0.0
      %1742 = vmatpush1.msra.mxu0 0.0
      %1743 = vmatprep.subr.mxu0 0.0
      %1744 = vmatpush1.msra.mxu0 0.0
      %1745 = vmatprep.subr.mxu0 0.0
      %1746 = vmatpush1.msra.mxu0 0.0
      %1747 = vmatprep.subr.mxu0 0.0
      %1748 = vmatpush1.msra.mxu0 0.0
      %1749 = vmatprep.subr.mxu0 0.0
      %1750 = vmatpush1.msra.mxu0 0.0
      %1751 = vmatprep.subr.mxu0 0.0
      %1752 = vmatpush1.msra.mxu0 0.0
      %1753 = vmatprep.subr.mxu0 0.0
      %1754 = vmatpush1.msra.mxu0 0.0
      %1755 = vmatprep.subr.mxu0 0.0
      %1756 = vmatpush1.msra.mxu0 0.0
      %1757 = vmatprep.subr.mxu0 0.0
      %1758 = vmatpush1.msra.mxu0 0.0
      %1759 = vmatprep.subr.mxu0 0.0
      %1760 = vmatpush1.msra.mxu0 0.0
      %1761 = vmatprep.subr.mxu0 0.0
      %1762 = vmatpush1.msra.mxu0 0.0
      %1763 = vmatprep.subr.mxu0 0.0
      %1764 = vmatpush1.msra.mxu0 0.0
      %1765 = vmatprep.subr.mxu0 0.0
      %1766 = vmatpush1.msra.mxu0 0.0
      %1767 = vmatprep.subr.mxu0 0.0
      %1768 = vmatpush1.msra.mxu0 0.0
      %1769 = vmatprep.subr.mxu0 0.0
      %1770 = vmatpush1.msra.mxu0 0.0
      %1771 = vmatprep.subr.mxu0 0.0
      %1772 = vmatpush1.msra.mxu0 0.0
      %1773 = vmatprep.subr.mxu0 0.0
      %1774 = vmatpush1.msra.mxu0 0.0
      %1775 = vmatprep.mubr.f32.mxu0 0.0
      %1776 = vmatmul.mubr.f32.gmra.mrb[0].mxu0 %v1623
      %v1777 = vpop.f32.mrb[0].mxu0
      %v1778 = vadd.f32 %v1706, %v1777
      %v1779 = vpop.f32.mrb[0].mxu0
      %1780 = vdwg.mxu0
      %v1781 = vtanh.pop %v1695
      %v1782 = vmul.f32 %v1781, 0.1
      %v1783 = vmul.f32 %v1782, 1.442695
      %v1784 = vpow.pop %v1783
      %v1785 = vmul.f32 %v1435, %v1784
      %v1786 = vadd.f32 %v1785, %v1778
      %s1787 = scalar_lea.vmem %s1, 6
      %v1788 = vld [vmem:[%s1787] sm:$0x3]
      %s1789 = scalar_lea.vmem %s2, 3
      %v1790 = vld [vmem:[%s1789] sm:$0x1]
      %v1792 = vlaneseq
      %v1793 = vshrl.u32 %v1792, 7
      %v1794 = vsub.s32 0, %v1793
      %v1795 = vrot.slane %v1790, %v1794
      %v1798 = vsel %vm445, %v1786, 0
      %v1801 = vsel %vm449, %v1788, 0
      %1803 = vmatprep.subr.mxu0 0.0
      %1804 = vmatpush1.msra.mxu0 %v1801
      %1805 = vmatprep.subr.mxu0 0.0
      %1806 = vmatpush1.msra.mxu0 0.0
      %1807 = vmatprep.subr.mxu0 0.0
      %1808 = vmatpush1.msra.mxu0 0.0
      %1809 = vmatprep.subr.mxu0 0.0
      %1810 = vmatpush1.msra.mxu0 0.0
      %1811 = vmatprep.subr.mxu0 0.0
      %1812 = vmatpush1.msra.mxu0 0.0
      %1813 = vmatprep.subr.mxu0 0.0
      %1814 = vmatpush1.msra.mxu0 0.0
      %1815 = vmatprep.subr.mxu0 0.0
      %1816 = vmatpush1.msra.mxu0 0.0
      %1817 = vmatprep.subr.mxu0 0.0
      %1818 = vmatpush1.msra.mxu0 0.0
      %1819 = vmatprep.subr.mxu0 0.0
      %1820 = vmatpush1.msra.mxu0 0.0
      %1821 = vmatprep.subr.mxu0 0.0
      %1822 = vmatpush1.msra.mxu0 0.0
      %1823 = vmatprep.subr.mxu0 0.0
      %1824 = vmatpush1.msra.mxu0 0.0
      %1825 = vmatprep.subr.mxu0 0.0
      %1826 = vmatpush1.msra.mxu0 0.0
      %1827 = vmatprep.subr.mxu0 0.0
      %1828 = vmatpush1.msra.mxu0 0.0
      %1829 = vmatprep.subr.mxu0 0.0
      %1830 = vmatpush1.msra.mxu0 0.0
      %1831 = vmatprep.subr.mxu0 0.0
      %1832 = vmatpush1.msra.mxu0 0.0
      %1833 = vmatprep.subr.mxu0 0.0
      %1834 = vmatpush1.msra.mxu0 0.0
      %1835 = vmatprep.subr.mxu0 0.0
      %1836 = vmatpush1.msra.mxu0 0.0
      %1837 = vmatprep.subr.mxu0 0.0
      %1838 = vmatpush1.msra.mxu0 0.0
      %1839 = vmatprep.subr.mxu0 0.0
      %1840 = vmatpush1.msra.mxu0 0.0
      %1841 = vmatprep.subr.mxu0 0.0
      %1842 = vmatpush1.msra.mxu0 0.0
      %1843 = vmatprep.subr.mxu0 0.0
      %1844 = vmatpush1.msra.mxu0 0.0
      %1845 = vmatprep.subr.mxu0 0.0
      %1846 = vmatpush1.msra.mxu0 0.0
      %1847 = vmatprep.subr.mxu0 0.0
      %1848 = vmatpush1.msra.mxu0 0.0
      %1849 = vmatprep.subr.mxu0 0.0
      %1850 = vmatpush1.msra.mxu0 0.0
      %1851 = vmatprep.subr.mxu0 0.0
      %1852 = vmatpush1.msra.mxu0 0.0
      %1853 = vmatprep.subr.mxu0 0.0
      %1854 = vmatpush1.msra.mxu0 0.0
      %1855 = vmatprep.subr.mxu0 0.0
      %1856 = vmatpush1.msra.mxu0 0.0
      %1857 = vmatprep.subr.mxu0 0.0
      %1858 = vmatpush1.msra.mxu0 0.0
      %1859 = vmatprep.subr.mxu0 0.0
      %1860 = vmatpush1.msra.mxu0 0.0
      %1861 = vmatprep.subr.mxu0 0.0
      %1862 = vmatpush1.msra.mxu0 0.0
      %1863 = vmatprep.subr.mxu0 0.0
      %1864 = vmatpush1.msra.mxu0 0.0
      %1865 = vmatprep.subr.mxu0 0.0
      %1866 = vmatpush1.msra.mxu0 0.0
      %1867 = vmatprep.mubr.f32.mxu0 0.0
      %1868 = vmatmul.mubr.f32.gmra.mrb[0].mxu0 %v1798
      %v1869 = vpop.f32.mrb[0].mxu0
      %v1870 = vadd.f32 %v1795, %v1869
      %v1871 = vpop.f32.mrb[0].mxu0
      %1872 = vdwg.mxu0
      %v1873 = vmax.f32 %v1870, 0.0
      %s1874 = scalar_lea.vmem %s3, 6
      %v1875 = vld [vmem:[%s1874] sm:$0x3]
      %s1876 = scalar_lea.vmem %s4, 3
      %v1877 = vld [vmem:[%s1876] sm:$0x1]
      %v1879 = vlaneseq
      %v1880 = vshrl.u32 %v1879, 7
      %v1881 = vsub.s32 0, %v1880
      %v1882 = vrot.slane %v1877, %v1881
      %v1885 = vsel %vm445, %v1873, 0
      %v1888 = vsel %vm449, %v1875, 0
      %1890 = vmatprep.subr.mxu0 0.0
      %1891 = vmatpush1.msra.mxu0 %v1888
      %1892 = vmatprep.subr.mxu0 0.0
      %1893 = vmatpush1.msra.mxu0 0.0
      %1894 = vmatprep.subr.mxu0 0.0
      %1895 = vmatpush1.msra.mxu0 0.0
      %1896 = vmatprep.subr.mxu0 0.0
      %1897 = vmatpush1.msra.mxu0 0.0
      %1898 = vmatprep.subr.mxu0 0.0
      %1899 = vmatpush1.msra.mxu0 0.0
      %1900 = vmatprep.subr.mxu0 0.0
      %1901 = vmatpush1.msra.mxu0 0.0
      %1902 = vmatprep.subr.mxu0 0.0
      %1903 = vmatpush1.msra.mxu0 0.0
      %1904 = vmatprep.subr.mxu0 0.0
      %1905 = vmatpush1.msra.mxu0 0.0
      %1906 = vmatprep.subr.mxu0 0.0
      %1907 = vmatpush1.msra.mxu0 0.0
      %1908 = vmatprep.subr.mxu0 0.0
      %1909 = vmatpush1.msra.mxu0 0.0
      %1910 = vmatprep.subr.mxu0 0.0
      %1911 = vmatpush1.msra.mxu0 0.0
      %1912 = vmatprep.subr.mxu0 0.0
      %1913 = vmatpush1.msra.mxu0 0.0
      %1914 = vmatprep.subr.mxu0 0.0
      %1915 = vmatpush1.msra.mxu0 0.0
      %1916 = vmatprep.subr.mxu0 0.0
      %1917 = vmatpush1.msra.mxu0 0.0
      %1918 = vmatprep.subr.mxu0 0.0
      %1919 = vmatpush1.msra.mxu0 0.0
      %1920 = vmatprep.subr.mxu0 0.0
      %1921 = vmatpush1.msra.mxu0 0.0
      %1922 = vmatprep.subr.mxu0 0.0
      %1923 = vmatpush1.msra.mxu0 0.0
      %1924 = vmatprep.subr.mxu0 0.0
      %1925 = vmatpush1.msra.mxu0 0.0
      %1926 = vmatprep.subr.mxu0 0.0
      %1927 = vmatpush1.msra.mxu0 0.0
      %1928 = vmatprep.subr.mxu0 0.0
      %1929 = vmatpush1.msra.mxu0 0.0
      %1930 = vmatprep.subr.mxu0 0.0
      %1931 = vmatpush1.msra.mxu0 0.0
      %1932 = vmatprep.subr.mxu0 0.0
      %1933 = vmatpush1.msra.mxu0 0.0
      %1934 = vmatprep.subr.mxu0 0.0
      %1935 = vmatpush1.msra.mxu0 0.0
      %1936 = vmatprep.subr.mxu0 0.0
      %1937 = vmatpush1.msra.mxu0 0.0
      %1938 = vmatprep.subr.mxu0 0.0
      %1939 = vmatpush1.msra.mxu0 0.0
      %1940 = vmatprep.subr.mxu0 0.0
      %1941 = vmatpush1.msra.mxu0 0.0
      %1942 = vmatprep.subr.mxu0 0.0
      %1943 = vmatpush1.msra.mxu0 0.0
      %1944 = vmatprep.subr.mxu0 0.0
      %1945 = vmatpush1.msra.mxu0 0.0
      %1946 = vmatprep.subr.mxu0 0.0
      %1947 = vmatpush1.msra.mxu0 0.0
      %1948 = vmatprep.subr.mxu0 0.0
      %1949 = vmatpush1.msra.mxu0 0.0
      %1950 = vmatprep.subr.mxu0 0.0
      %1951 = vmatpush1.msra.mxu0 0.0
      %1952 = vmatprep.subr.mxu0 0.0
      %1953 = vmatpush1.msra.mxu0 0.0
      %1954 = vmatprep.mubr.f32.mxu0 0.0
      %1955 = vmatmul.mubr.f32.gmra.mrb[0].mxu0 %v1885
      %v1956 = vpop.f32.mrb[0].mxu0
      %v1957 = vadd.f32 %v1882, %v1956
      %v1958 = vpop.f32.mrb[0].mxu0
      %1959 = vdwg.mxu0
      %v1960 = vmax.f32 %v1957, 0.0
      %s1961 = scalar_lea.vmem %s5, 6
      %v1962 = vld [vmem:[%s1961] sm:$0x3]
      %s1963 = scalar_lea.vmem %s6, 3
      %v1964 = vld [vmem:[%s1963] sm:$0x1]
      %v1966 = vlaneseq
      %v1967 = vshrl.u32 %v1966, 7
      %v1968 = vsub.s32 0, %v1967
      %v1969 = vrot.slane %v1964, %v1968
      %v1972 = vsel %vm445, %v1960, 0
      %v1975 = vsel %vm449, %v1962, 0
      %1977 = vmatprep.subr.mxu0 0.0
      %1978 = vmatpush1.msra.mxu0 %v1975
      %1979 = vmatprep.subr.mxu0 0.0
      %1980 = vmatpush1.msra.mxu0 0.0
      %1981 = vmatprep.subr.mxu0 0.0
      %1982 = vmatpush1.msra.mxu0 0.0
      %1983 = vmatprep.subr.mxu0 0.0
      %1984 = vmatpush1.msra.mxu0 0.0
      %1985 = vmatprep.subr.mxu0 0.0
      %1986 = vmatpush1.msra.mxu0 0.0
      %1987 = vmatprep.subr.mxu0 0.0
      %1988 = vmatpush1.msra.mxu0 0.0
      %1989 = vmatprep.subr.mxu0 0.0
      %1990 = vmatpush1.msra.mxu0 0.0
      %1991 = vmatprep.subr.mxu0 0.0
      %1992 = vmatpush1.msra.mxu0 0.0
      %1993 = vmatprep.subr.mxu0 0.0
      %1994 = vmatpush1.msra.mxu0 0.0
      %1995 = vmatprep.subr.mxu0 0.0
      %1996 = vmatpush1.msra.mxu0 0.0
      %1997 = vmatprep.subr.mxu0 0.0
      %1998 = vmatpush1.msra.mxu0 0.0
      %1999 = vmatprep.subr.mxu0 0.0
      %2000 = vmatpush1.msra.mxu0 0.0
      %2001 = vmatprep.subr.mxu0 0.0
      %2002 = vmatpush1.msra.mxu0 0.0
      %2003 = vmatprep.subr.mxu0 0.0
      %2004 = vmatpush1.msra.mxu0 0.0
      %2005 = vmatprep.subr.mxu0 0.0
      %2006 = vmatpush1.msra.mxu0 0.0
      %2007 = vmatprep.subr.mxu0 0.0
      %2008 = vmatpush1.msra.mxu0 0.0
      %2009 = vmatprep.subr.mxu0 0.0
      %2010 = vmatpush1.msra.mxu0 0.0
      %2011 = vmatprep.subr.mxu0 0.0
      %2012 = vmatpush1.msra.mxu0 0.0
      %2013 = vmatprep.subr.mxu0 0.0
      %2014 = vmatpush1.msra.mxu0 0.0
      %2015 = vmatprep.subr.mxu0 0.0
      %2016 = vmatpush1.msra.mxu0 0.0
      %2017 = vmatprep.subr.mxu0 0.0
      %2018 = vmatpush1.msra.mxu0 0.0
      %2019 = vmatprep.subr.mxu0 0.0
      %2020 = vmatpush1.msra.mxu0 0.0
      %2021 = vmatprep.subr.mxu0 0.0
      %2022 = vmatpush1.msra.mxu0 0.0
      %2023 = vmatprep.subr.mxu0 0.0
      %2024 = vmatpush1.msra.mxu0 0.0
      %2025 = vmatprep.subr.mxu0 0.0
      %2026 = vmatpush1.msra.mxu0 0.0
      %2027 = vmatprep.subr.mxu0 0.0
      %2028 = vmatpush1.msra.mxu0 0.0
      %2029 = vmatprep.subr.mxu0 0.0
      %2030 = vmatpush1.msra.mxu0 0.0
      %2031 = vmatprep.subr.mxu0 0.0
      %2032 = vmatpush1.msra.mxu0 0.0
      %2033 = vmatprep.subr.mxu0 0.0
      %2034 = vmatpush1.msra.mxu0 0.0
      %2035 = vmatprep.subr.mxu0 0.0
      %2036 = vmatpush1.msra.mxu0 0.0
      %2037 = vmatprep.subr.mxu0 0.0
      %2038 = vmatpush1.msra.mxu0 0.0
      %2039 = vmatprep.subr.mxu0 0.0
      %2040 = vmatpush1.msra.mxu0 0.0
      %2041 = vmatprep.mubr.f32.mxu0 0.0
      %2042 = vmatmul.mubr.f32.gmra.mrb[0].mxu0 %v1972
      %v2043 = vpop.f32.mrb[0].mxu0
      %v2044 = vadd.f32 %v1969, %v2043
      %v2045 = vpop.f32.mrb[0].mxu0
      %2046 = vdwg.mxu0
      %s2047 = scalar_lea.vmem %s7, 6
      %v2048 = vld [vmem:[%s2047] sm:$0x3]
      %s2049 = scalar_lea.vmem %s8, 3
      %v2050 = vld [vmem:[%s2049] sm:$0x1]
      %v2052 = vlaneseq
      %v2053 = vshrl.u32 %v2052, 7
      %v2054 = vsub.s32 0, %v2053
      %v2055 = vrot.slane %v2050, %v2054
      %v2058 = vsel %vm449, %v2048, 0
      %2060 = vmatprep.subr.mxu0 0.0
      %2061 = vmatpush1.msra.mxu0 %v2058
      %2062 = vmatprep.subr.mxu0 0.0
      %2063 = vmatpush1.msra.mxu0 0.0
      %2064 = vmatprep.subr.mxu0 0.0
      %2065 = vmatpush1.msra.mxu0 0.0
      %2066 = vmatprep.subr.mxu0 0.0
      %2067 = vmatpush1.msra.mxu0 0.0
      %2068 = vmatprep.subr.mxu0 0.0
      %2069 = vmatpush1.msra.mxu0 0.0
      %2070 = vmatprep.subr.mxu0 0.0
      %2071 = vmatpush1.msra.mxu0 0.0
      %2072 = vmatprep.subr.mxu0 0.0
      %2073 = vmatpush1.msra.mxu0 0.0
      %2074 = vmatprep.subr.mxu0 0.0
      %2075 = vmatpush1.msra.mxu0 0.0
      %2076 = vmatprep.subr.mxu0 0.0
      %2077 = vmatpush1.msra.mxu0 0.0
      %2078 = vmatprep.subr.mxu0 0.0
      %2079 = vmatpush1.msra.mxu0 0.0
      %2080 = vmatprep.subr.mxu0 0.0
      %2081 = vmatpush1.msra.mxu0 0.0
      %2082 = vmatprep.subr.mxu0 0.0
      %2083 = vmatpush1.msra.mxu0 0.0
      %2084 = vmatprep.subr.mxu0 0.0
      %2085 = vmatpush1.msra.mxu0 0.0
      %2086 = vmatprep.subr.mxu0 0.0
      %2087 = vmatpush1.msra.mxu0 0.0
      %2088 = vmatprep.subr.mxu0 0.0
      %2089 = vmatpush1.msra.mxu0 0.0
      %2090 = vmatprep.subr.mxu0 0.0
      %2091 = vmatpush1.msra.mxu0 0.0
      %2092 = vmatprep.subr.mxu0 0.0
      %2093 = vmatpush1.msra.mxu0 0.0
      %2094 = vmatprep.subr.mxu0 0.0
      %2095 = vmatpush1.msra.mxu0 0.0
      %2096 = vmatprep.subr.mxu0 0.0
      %2097 = vmatpush1.msra.mxu0 0.0
      %2098 = vmatprep.subr.mxu0 0.0
      %2099 = vmatpush1.msra.mxu0 0.0
      %2100 = vmatprep.subr.mxu0 0.0
      %2101 = vmatpush1.msra.mxu0 0.0
      %2102 = vmatprep.subr.mxu0 0.0
      %2103 = vmatpush1.msra.mxu0 0.0
      %2104 = vmatprep.subr.mxu0 0.0
      %2105 = vmatpush1.msra.mxu0 0.0
      %2106 = vmatprep.subr.mxu0 0.0
      %2107 = vmatpush1.msra.mxu0 0.0
      %2108 = vmatprep.subr.mxu0 0.0
      %2109 = vmatpush1.msra.mxu0 0.0
      %2110 = vmatprep.subr.mxu0 0.0
      %2111 = vmatpush1.msra.mxu0 0.0
      %2112 = vmatprep.subr.mxu0 0.0
      %2113 = vmatpush1.msra.mxu0 0.0
      %2114 = vmatprep.subr.mxu0 0.0
      %2115 = vmatpush1.msra.mxu0 0.0
      %2116 = vmatprep.subr.mxu0 0.0
      %2117 = vmatpush1.msra.mxu0 0.0
      %2118 = vmatprep.subr.mxu0 0.0
      %2119 = vmatpush1.msra.mxu0 0.0
      %2120 = vmatprep.subr.mxu0 0.0
      %2121 = vmatpush1.msra.mxu0 0.0
      %2122 = vmatprep.subr.mxu0 0.0
      %2123 = vmatpush1.msra.mxu0 0.0
      %2124 = vmatprep.mubr.f32.mxu0 0.0
      %2125 = vmatmul.mubr.f32.gmra.mrb[0].mxu0 %v1972
      %v2126 = vpop.f32.mrb[0].mxu0
      %v2127 = vadd.f32 %v2055, %v2126
      %v2128 = vpop.f32.mrb[0].mxu0
      %2129 = vdwg.mxu0
      %v2130 = vtanh.pop %v2044
      %v2131 = vmul.f32 %v2130, 0.1
      %v2132 = vmul.f32 %v2131, 1.442695
      %v2133 = vpow.pop %v2132
      %v2134 = vmul.f32 %v1289, %v2133
      %v2135 = vadd.f32 %v2134, %v2127
      %2136 = vrot.lane.b32.xlu0 %v1786, 2
      %v2137 = vpop.permute.xlu0 %2136
      %v2139 = vsel %vm445, %v2135, %v2137
      %vm2140 = vcmask 31744
      %2141 = vst.msk [vmem:[%s435] sm:$0xff] %vm2140, %v2139
      %p2142 = scmp.lt.s32.totalorder %s24, 1
      %s2143 = scalar_select %p2142, %s24, 1
      %s2144 = smul.addr %s2143, 8
      %s2145 = scalar_lea.vmem %s13, %s2144
      // Predicated region
      $region73: #{tpu_custom_call.1} parent=71 // pred_check
        %p2146 = pneg %p320
      $region74: #{tpu_custom_call.1} parent=71 // pred_check_branch
        %2148 = sbr.rel (%p2146) target = $region76
      $region75: #{tpu_custom_call.1} parent=71 // pred_region
        _
      $region76: #{tpu_custom_call.1} parent=71 // pred_fallthru
        _
    $region72: #{tpu_custom_call.1} parent=5 // pred_fallthru
      _
    %p2149 = scmp.le.s32.totalorder 2, %s19
    // Predicated region
    $region77: #{tpu_custom_call.1} parent=5 // pred_check
      %p2150 = pneg %p2149
    $region78: #{tpu_custom_call.1} parent=5 // pred_check_branch
      %2152 = sbr.rel (%p2150) target = $region80
    $region79: #{tpu_custom_call.1} parent=5 // pred_region
      %s2153 = ssub.s32 %s19, 2
      // Predicated region
      $region81: #{tpu_custom_call.1} parent=79 // pred_check
        %p2154 = pneg %p326
      $region82: #{tpu_custom_call.1} parent=79 // pred_check_branch
        %2156 = sbr.rel (%p2154) target = $region84
      $region83: #{tpu_custom_call.1} parent=79 // pred_region
        %p2157 = scmp.lt.s32.totalorder %s25, 1
        %s2158 = scalar_select %p2157, %s25, 1
        %s2159 = smul.addr %s2158, 8
        %s2160 = scalar_lea.vmem %s13, %s2159
      $region84: #{tpu_custom_call.1} parent=79 // pred_fallthru
        _
    $region80: #{tpu_custom_call.1} parent=5 // pred_fallthru
      _
  $region6: #{tpu_custom_call.1} parent=0 // loop_footer
    %s23 = sadd.s32 1, %s19
  $region7: #{tpu_custom_call.1} parent=0 // loop_footer_branch
    %18 = sbr.rel target = $region3
  $region8: #{tpu_custom_call.1} parent=0 // loop_exit
    _

</llo_original>
